<compile_context>
chip_gen: v5e
topology: v5e:2x2
jax: 0.10.0
libtpu: 0.0.40
codegen_flags: <defaults>
</compile_context>

<pallas_src>
import jax
import jax.numpy as jnp
import numpy as np
from jax import lax
from jax.experimental import pallas as pl
from jax.experimental.pallas import tpu as pltpu


_MAX_BATCH_BLOCK = 128          # token rows per grid step (multiple of 8)
_GX_VMEM_BUDGET = 8 * 1024 * 1024   # per-block x-gate scratch budget (bytes)


def _round_up(x, m):
    return ((x + m - 1) // m) * m


def _make_bilstm_kernel(T, TB, H, VP, S):
    """T: max char length, TB: batch block, H: hidden, VP: padded vocab,
    S: padded per-gate slab width (= lane width of h/c/out)."""
    N = T * TB
    unroll = True if T <= 16 else 4

    def kernel(len_ref, idxf_ref, idxb_ref, wgf_ref, wgb_ref, b_ref, whh_ref,
               out_ref, gx_ref):
        # ---- Phase 1: fused embedding lookup + input projection ------------
        # emb tables are pre-folded into the projections in the wrapper, so the
        # whole input path is two dense one-hot MXU matmuls (fwd reads char at
        # time t, bwd reads char at time len-1-t -- re-indexed in the wrapper),
        # both landing in the SAME row block t of the gx scratch.  Bias folded.
        lane = lax.broadcasted_iota(jnp.int32, (N, VP), 1)
        oh_f = (lane == idxf_ref[...]).astype(jnp.float32)      # (N, VP)
        oh_b = (lane == idxb_ref[...]).astype(jnp.float32)
        gx_ref[...] = (
            jnp.dot(oh_f, wgf_ref[...], preferred_element_type=jnp.float32)
            + jnp.dot(oh_b, wgb_ref[...], preferred_element_type=jnp.float32)
            + b_ref[...])                                       # (N, 4S)

        # ---- Phase 2: tiny resident operands only ---------------------------
        len_col = len_ref[...]                                  # (TB, 1) int32
        whh = whh_ref[...]                                      # (S, 4S) block-diag

        # ---- Phase 3: lane-stacked fwd+bwd recurrence (fori_loop) ------------
        # h/c layout: lanes [0:H] = forward state, [H:2H] = backward state,
        # [2H:S] = zero padding.  Gate slab k occupies lanes [k*S : k*S+2H]
        # (fwd | bwd), so every elementwise op is lane-aligned with h/c.
        def step(t, carry):
            h, c = carry
            row0 = pl.multiple_of(t * TB, TB)
            gates = gx_ref[pl.ds(row0, TB), :] + jnp.dot(
                h, whh, preferred_element_type=jnp.float32)     # (TB, 4S)

            # gate order [i, f, o, g]: one contiguous sigmoid slab, one tanh
            sig = jax.nn.sigmoid(gates[:, 0:3 * S])
            g_gate = jnp.tanh(gates[:, 3 * S:4 * S])
            i_gate = sig[:, 0:S]
            f_gate = sig[:, S:2 * S]
            o_gate = sig[:, 2 * S:3 * S]

            c_new = f_gate * c + i_gate * g_gate
            h_new = o_gate * jnp.tanh(c_new)

            # PackedSequence semantics: both directions share the window t<len
            valid = t < len_col                                 # (TB, 1) bool
            h = jnp.where(valid, h_new, h)                      # lane-broadcast
            c = jnp.where(valid, c_new, c)
            return (h, c)

        h0 = jnp.zeros((TB, S), jnp.float32)
        c0 = jnp.zeros((TB, S), jnp.float32)
        h, _ = lax.fori_loop(0, T, step, (h0, c0), unroll=unroll)

        # encoding = concat([h_fwd_final, h_bwd_final], -1) already in lanes
        # 0:2H of h; single unmasked full-width store (wrapper slices [:, :2H]).
        out_ref[...] = h

    return kernel


@jax.jit
def char_lstm_embedding(indices, lengths, params):
    """indices: (T, B) int32, lengths: (B,) int32 -> (B, 2*H) float32."""
    emb = params["embedding"]                        # (V, E)
    V, E = emb.shape
    T, B = indices.shape
    H = params["whh_f"].shape[0]
    H2 = 2 * H
    S = _round_up(H2, 128)                           # per-gate slab lane width
    VP = _round_up(V, 128)

    # ---- parameter prep (layout plumbing; fused/folded by XLA under jit) ----
    def gates_iofg(w):
        # PyTorch gate order [i, f, g, o] -> [i, f, o, g] chunks
        i, f, g, o = jnp.split(w, 4, axis=-1)
        return (i, f, o, g)

    proj_f = gates_iofg(emb @ params["wih_f"])       # 4 x (V, H)  (fold emb in)
    proj_b = gates_iofg(emb @ params["wih_b"])
    bf, bb = gates_iofg(params["b_f"]), gates_iofg(params["b_b"])
    hf, hb = gates_iofg(params["whh_f"]), gates_iofg(params["whh_b"])

    wgf = jnp.zeros((VP, 4 * S), jnp.float32)        # fwd folded emb @ W_ih
    wgb = jnp.zeros((VP, 4 * S), jnp.float32)        # bwd folded emb @ W_ih
    bias = jnp.zeros((1, 4 * S), jnp.float32)
    whh = jnp.zeros((S, 4 * S), jnp.float32)         # block-diagonal recurrent W
    for k in range(4):
        c0 = k * S
        wgf = wgf.at[:V, c0:c0 + H].set(proj_f[k])
        wgb = wgb.at[:V, c0 + H:c0 + H2].set(proj_b[k])
        bias = bias.at[:, c0:c0 + H].set(bf[k])
        bias = bias.at[:, c0 + H:c0 + H2].set(bb[k])
        whh = whh.at[:H, c0:c0 + H].set(hf[k])
        whh = whh.at[H:H2, c0 + H:c0 + H2].set(hb[k])

    # ---- batch blocking: aim for >=2 grid blocks, keep gx scratch in budget --
    TB = min(_MAX_BATCH_BLOCK, max(8, _round_up((B + 1) // 2, 8)))
    while TB > 8 and T * TB * 4 * S * 4 > _GX_VMEM_BUDGET:
        TB = max(8, (TB // 2 // 8) * 8)
    B_pad = _round_up(B, TB)
    nB = B_pad // TB
    N = T * TB

    lengths = lengths.astype(jnp.int32)
    indices = indices.astype(jnp.int32)

    # backward direction re-indexed so that step t reads char position len-1-t;
    # then both directions share the validity window t < len (no lo/hi masks,
    # no time-reversed gx slice inside the kernel).
    t_ids = jnp.arange(T, dtype=jnp.int32)[:, None]              # (T, 1)
    pos_b = lengths[None, :] - 1 - t_ids                         # (T, B)
    idx_bwd = jnp.where(
        pos_b >= 0,
        jnp.take_along_axis(indices, jnp.clip(pos_b, 0, T - 1), axis=0),
        0)

    def block_flatten(a):                                        # (T,B) -> (nB*N, 1)
        a = jnp.pad(a, ((0, 0), (0, B_pad - B)))
        return a.reshape(T, nB, TB).transpose(1, 0, 2).reshape(nB * N, 1)

    idxf_flat = block_flatten(indices)
    idxb_flat = block_flatten(idx_bwd)
    len_col = jnp.pad(lengths, (0, B_pad - B)).reshape(B_pad, 1)

    kernel = _make_bilstm_kernel(T, TB, H, VP, S)
    out = pl.pallas_call(
        kernel,
        out_shape=jax.ShapeDtypeStruct((B_pad, S), jnp.float32),
        grid_spec=pltpu.PrefetchScalarGridSpec(
            num_scalar_prefetch=0,
            grid=(nB,),
            in_specs=[
                pl.BlockSpec((TB, 1), lambda i: (i, 0)),         # lengths
                pl.BlockSpec((N, 1), lambda i: (i, 0)),          # fwd char indices
                pl.BlockSpec((N, 1), lambda i: (i, 0)),          # bwd (len-reversed) indices
                pl.BlockSpec((VP, 4 * S), lambda i: (0, 0)),     # fwd folded emb@W_ih
                pl.BlockSpec((VP, 4 * S), lambda i: (0, 0)),     # bwd folded emb@W_ih
                pl.BlockSpec((1, 4 * S), lambda i: (0, 0)),      # bias (fwd|bwd)
                pl.BlockSpec((S, 4 * S), lambda i: (0, 0)),      # block-diag W_hh
            ],
            out_specs=pl.BlockSpec((TB, S), lambda i: (i, 0)),
            scratch_shapes=[
                pltpu.VMEM((N, 4 * S), jnp.float32),             # precomputed x-gates
            ],
        ),
        compiler_params=pltpu.CompilerParams(
            dimension_semantics=("parallel",)),
    )(len_col, idxf_flat, idxb_flat, wgf, wgb, bias, whh)
    return out[:B, :H2]


def _reference(indices, lengths, params):
    """Pure-JAX reference (lax.scan) for correctness checking."""
    emb = params["embedding"][indices]
    T, B, E = emb.shape
    H = params["whh_f"].shape[0]

    def run(wih, whh, b, reverse):
        def scan_fn(carry, inp):
            h, c = carry
            x_t, t = inp
            gates = x_t @ wih + h @ whh + b
            i = jax.nn.sigmoid(gates[:, :H])
            f = jax.nn.sigmoid(gates[:, H:2 * H])
            g = jnp.tanh(gates[:, 2 * H:3 * H])
            o = jax.nn.sigmoid(gates[:, 3 * H:])
            c_new = f * c + i * g
            h_new = o * jnp.tanh(c_new)
            valid = (t < lengths)[:, None]
            return (jnp.where(valid, h_new, h), jnp.where(valid, c_new, c)), None

        init = (jnp.zeros((B, H), jnp.float32), jnp.zeros((B, H), jnp.float32))
        (h, _), _ = lax.scan(scan_fn, init, (emb, jnp.arange(T)), reverse=reverse)
        return h

    h_f = run(params["wih_f"], params["whh_f"], params["b_f"], False)
    h_b = run(params["wih_b"], params["whh_b"], params["b_b"], True)
    return jnp.concatenate([h_f, h_b], axis=-1)


def init_params(key, vocab_size, embedding_dim, hidden_dim, padding_idx=0):
    ks = jax.random.split(key, 9)
    bound = 1.0 / np.sqrt(hidden_dim)
    E, H = embedding_dim, hidden_dim

    def u(k, shape):
        return jax.random.uniform(k, shape, jnp.float32, -bound, bound)

    emb = jax.random.normal(ks[0], (vocab_size, E), jnp.float32)
    emb = emb.at[padding_idx].set(0.0)            # padding_idx row is zero
    params = {
        "embedding": emb,
        # stored pre-transposed: (in_features, 4H); bias = b_ih + b_hh as (1, 4H)
        # PyTorch gate order [i, f, g, o] (kernel wrapper re-permutes).
        "wih_f": u(ks[1], (E, 4 * H)),
        "whh_f": u(ks[2], (H, 4 * H)),
        "b_f": u(ks[3], (1, 4 * H)) + u(ks[4], (1, 4 * H)),
        "wih_b": u(ks[5], (E, 4 * H)),
        "whh_b": u(ks[6], (H, 4 * H)),
        "b_b": u(ks[7], (1, 4 * H)) + u(ks[8], (1, 4 * H)),
    }
    return params


if __name__ == "__main__":
    V, E, H = 20, 16, 32          # vocab, char-embedding dim, LSTM hidden dim
    T, B = 8, 4                   # max char-sequence length, batch of tokens

    key = jax.random.PRNGKey(0)
    k_idx, k_param = jax.random.split(key)

    # Emulate a PackedSequence: dense (T, B) indices + per-sequence lengths,
    # positions beyond the length are padded with padding_idx=0.
    lengths = jnp.array([8, 5, 3, 6], dtype=jnp.int32)
    raw_idx = jax.random.randint(k_idx, (T, B), 1, V, dtype=jnp.int32)
    time_ids = jnp.arange(T, dtype=jnp.int32)[:, None]
    indices = jnp.where(time_ids < lengths[None, :], raw_idx, 0)

    params = init_params(k_param, V, E, H, padding_idx=0)

    out = char_lstm_embedding(indices, lengths, params)
    out = jax.block_until_ready(out)

    ref = jax.block_until_ready(_reference(indices, lengths, params))
    np.testing.assert_allclose(np.asarray(out), np.asarray(ref),
                               rtol=1e-4, atol=1e-4)
    assert out.shape == (B, 2 * H)
    print("KERNEL_OK")
</pallas_src>

<mosaic_0001>
module attributes {stable_mosaic.version = 11 : i64} {
  func.func @kernel(%arg0: i32, %arg1: memref<8x1xi32, #tpu.memory_space<vmem>>, %arg2: memref<64x1xi32, #tpu.memory_space<vmem>>, %arg3: memref<64x1xi32, #tpu.memory_space<vmem>>, %arg4: memref<128x512xf32, #tpu.memory_space<vmem>>, %arg5: memref<128x512xf32, #tpu.memory_space<vmem>>, %arg6: memref<1x512xf32, #tpu.memory_space<vmem>>, %arg7: memref<128x512xf32, #tpu.memory_space<vmem>>, %arg8: memref<8x128xf32, #tpu.memory_space<vmem>>, %arg9: memref<64x512xf32, #tpu.memory_space<vmem>>) attributes {dimension_semantics = [#tpu.dimension_semantics<parallel>], iteration_bounds = array<i64: 1>, scalar_prefetch = 0 : i64, scratch_operands = 1 : i64, tpu.core_type = #tpu.core_type<tc>, window_params = [{transform_indices = @transform_0, window_bounds = array<i64: 8, 1>}, {transform_indices = @transform_1, window_bounds = array<i64: 64, 1>}, {transform_indices = @transform_2, window_bounds = array<i64: 64, 1>}, {pipeline_mode = #tpu.pipeline_mode<synchronous>, transform_indices = @transform_3, window_bounds = array<i64: 128, 512>}, {pipeline_mode = #tpu.pipeline_mode<synchronous>, transform_indices = @transform_4, window_bounds = array<i64: 128, 512>}, {pipeline_mode = #tpu.pipeline_mode<synchronous>, transform_indices = @transform_5, window_bounds = array<i64: 1, 512>}, {pipeline_mode = #tpu.pipeline_mode<synchronous>, transform_indices = @transform_6, window_bounds = array<i64: 128, 512>}, {transform_indices = @transform_7, window_bounds = array<i64: 8, 128>}]} {
    %0 = tpu.iota {dimensions = array<i32: 1>} : vector<64x128xi32>
    %c0 = arith.constant 0 : index
    %c0_0 = arith.constant 0 : index
    %1 = vector.load %arg2[%c0, %c0_0] : memref<64x1xi32, #tpu.memory_space<vmem>>, vector<64x1xi32>
    %2 = vector.broadcast %1 : vector<64x1xi32> to vector<64x128xi32>
    %3 = arith.cmpi eq, %0, %2 : vector<64x128xi32>
    %4 = arith.extui %3 : vector<64x128xi1> to vector<64x128xi32>
    %5 = arith.sitofp %4 : vector<64x128xi32> to vector<64x128xf32>
    %c0_1 = arith.constant 0 : index
    %c0_2 = arith.constant 0 : index
    %6 = vector.load %arg3[%c0_1, %c0_2] : memref<64x1xi32, #tpu.memory_space<vmem>>, vector<64x1xi32>
    %7 = vector.broadcast %6 : vector<64x1xi32> to vector<64x128xi32>
    %8 = arith.cmpi eq, %0, %7 : vector<64x128xi32>
    %9 = arith.extui %8 : vector<64x128xi1> to vector<64x128xi32>
    %10 = arith.sitofp %9 : vector<64x128xi32> to vector<64x128xf32>
    %c0_3 = arith.constant 0 : index
    %c0_4 = arith.constant 0 : index
    %11 = vector.load %arg4[%c0_3, %c0_4] : memref<128x512xf32, #tpu.memory_space<vmem>>, vector<128x512xf32>
    %cst = arith.constant dense<0.000000e+00> : vector<64x512xf32>
    %12 = tpu.matmul %5, %11, %cst {dimension_numbers = #tpu.dot_dimension_numbers<[1], [0], [0], [1], [0, 0, 1, 1], [], []>} : vector<64x128xf32>, vector<128x512xf32>, vector<64x512xf32> -> vector<64x512xf32>
    %c0_5 = arith.constant 0 : index
    %c0_6 = arith.constant 0 : index
    %13 = vector.load %arg5[%c0_5, %c0_6] : memref<128x512xf32, #tpu.memory_space<vmem>>, vector<128x512xf32>
    %cst_7 = arith.constant dense<0.000000e+00> : vector<64x512xf32>
    %14 = tpu.matmul %10, %13, %cst_7 {dimension_numbers = #tpu.dot_dimension_numbers<[1], [0], [0], [1], [0, 0, 1, 1], [], []>} : vector<64x128xf32>, vector<128x512xf32>, vector<64x512xf32> -> vector<64x512xf32>
    %15 = arith.addf %12, %14 : vector<64x512xf32>
    %c0_8 = arith.constant 0 : index
    %c0_9 = arith.constant 0 : index
    %16 = vector.load %arg6[%c0_8, %c0_9] : memref<1x512xf32, #tpu.memory_space<vmem>>, vector<1x512xf32>
    %17 = vector.broadcast %16 : vector<1x512xf32> to vector<64x512xf32>
    %18 = arith.addf %15, %17 : vector<64x512xf32>
    %c0_10 = arith.constant 0 : index
    %c0_11 = arith.constant 0 : index
    %19 = vector.load %arg9[%c0_10, %c0_11] : memref<64x512xf32, #tpu.memory_space<vmem>>, vector<64x512xf32>
    tpu.vector_store %arg9[%c0_10, %c0_11], %18 {strides = array<i32>} : memref<64x512xf32, #tpu.memory_space<vmem>>, vector<64x512xf32>,
    %c0_12 = arith.constant 0 : index
    %c0_13 = arith.constant 0 : index
    %20 = vector.load %arg1[%c0_12, %c0_13] : memref<8x1xi32, #tpu.memory_space<vmem>>, vector<8x1xi32>
    %c0_14 = arith.constant 0 : index
    %c0_15 = arith.constant 0 : index
    %21 = vector.load %arg7[%c0_14, %c0_15] : memref<128x512xf32, #tpu.memory_space<vmem>>, vector<128x512xf32>
    %cst_16 = arith.constant 0.000000e+00 : f32
    %22 = vector.broadcast %cst_16 : f32 to vector<8x128xf32>
    %cst_17 = arith.constant 0.000000e+00 : f32
    %23 = vector.broadcast %cst_17 : f32 to vector<8x128xf32>
    %c0_i32 = arith.constant 0 : i32
    %c8_i32 = arith.constant 8 : i32
    %24 = arith.muli %c0_i32, %c8_i32 : i32
    %25 = tpu.assume_multiple %24, 8 : i32
    %26 = arith.index_cast %25 : i32 to index
    %c0_18 = arith.constant 0 : index
    %27 = vector.load %arg9[%26, %c0_18] : memref<64x512xf32, #tpu.memory_space<vmem>>, vector<8x512xf32>
    %cst_19 = arith.constant dense<0.000000e+00> : vector<8x512xf32>
    %28 = tpu.matmul %22, %21, %cst_19 {dimension_numbers = #tpu.dot_dimension_numbers<[1], [0], [0], [1], [0, 0, 1, 1], [], []>} : vector<8x128xf32>, vector<128x512xf32>, vector<8x512xf32> -> vector<8x512xf32>
    %29 = arith.addf %27, %28 : vector<8x512xf32>
    %30 = vector.extract_strided_slice %29 {offsets = [0, 0], sizes = [8, 384], strides = [1, 1]} : vector<8x512xf32> to vector<8x384xf32>
    %31 = arith.negf %30 : vector<8x384xf32>
    %32 = math.exp %31 : vector<8x384xf32>
    %cst_20 = arith.constant 1.000000e+00 : f32
    %33 = vector.broadcast %cst_20 : f32 to vector<8x384xf32>
    %34 = arith.addf %33, %32 : vector<8x384xf32>
    %35 = arith.divf %33, %34 : vector<8x384xf32>
    %36 = vector.extract_strided_slice %29 {offsets = [0, 384], sizes = [8, 128], strides = [1, 1]} : vector<8x512xf32> to vector<8x128xf32>
    %37 = math.tanh %36 : vector<8x128xf32>
    %38 = vector.extract_strided_slice %35 {offsets = [0, 0], sizes = [8, 128], strides = [1, 1]} : vector<8x384xf32> to vector<8x128xf32>
    %39 = vector.extract_strided_slice %35 {offsets = [0, 128], sizes = [8, 128], strides = [1, 1]} : vector<8x384xf32> to vector<8x128xf32>
    %40 = vector.extract_strided_slice %35 {offsets = [0, 256], sizes = [8, 128], strides = [1, 1]} : vector<8x384xf32> to vector<8x128xf32>
    %41 = arith.mulf %39, %23 : vector<8x128xf32>
    %42 = arith.mulf %38, %37 : vector<8x128xf32>
    %43 = arith.addf %41, %42 : vector<8x128xf32>
    %44 = math.tanh %43 : vector<8x128xf32>
    %45 = arith.mulf %40, %44 : vector<8x128xf32>
    %46 = vector.broadcast %c0_i32 : i32 to vector<8x1xi32>
    %47 = arith.cmpi slt, %46, %20 : vector<8x1xi32>
    %48 = vector.shape_cast %47 : vector<8x1xi1> to vector<8x1xi1>
    %49 = vector.broadcast %48 : vector<8x1xi1> to vector<8x128xi1>
    %50 = arith.select %49, %45, %22 : vector<8x128xi1>, vector<8x128xf32>
    %51 = vector.shape_cast %47 : vector<8x1xi1> to vector<8x1xi1>
    %52 = vector.broadcast %51 : vector<8x1xi1> to vector<8x128xi1>
    %53 = arith.select %52, %43, %23 : vector<8x128xi1>, vector<8x128xf32>
    %c1_i32 = arith.constant 1 : i32
    %c8_i32_21 = arith.constant 8 : i32
    %54 = arith.muli %c1_i32, %c8_i32_21 : i32
    %55 = tpu.assume_multiple %54, 8 : i32
    %56 = arith.index_cast %55 : i32 to index
    %c0_22 = arith.constant 0 : index
    %57 = vector.load %arg9[%56, %c0_22] : memref<64x512xf32, #tpu.memory_space<vmem>>, vector<8x512xf32>
    %cst_23 = arith.constant dense<0.000000e+00> : vector<8x512xf32>
    %58 = tpu.matmul %50, %21, %cst_23 {dimension_numbers = #tpu.dot_dimension_numbers<[1], [0], [0], [1], [0, 0, 1, 1], [], []>} : vector<8x128xf32>, vector<128x512xf32>, vector<8x512xf32> -> vector<8x512xf32>
    %59 = arith.addf %57, %58 : vector<8x512xf32>
    %60 = vector.extract_strided_slice %59 {offsets = [0, 0], sizes = [8, 384], strides = [1, 1]} : vector<8x512xf32> to vector<8x384xf32>
    %61 = arith.negf %60 : vector<8x384xf32>
    %62 = math.exp %61 : vector<8x384xf32>
    %cst_24 = arith.constant 1.000000e+00 : f32
    %63 = vector.broadcast %cst_24 : f32 to vector<8x384xf32>
    %64 = arith.addf %63, %62 : vector<8x384xf32>
    %65 = arith.divf %63, %64 : vector<8x384xf32>
    %66 = vector.extract_strided_slice %59 {offsets = [0, 384], sizes = [8, 128], strides = [1, 1]} : vector<8x512xf32> to vector<8x128xf32>
    %67 = math.tanh %66 : vector<8x128xf32>
    %68 = vector.extract_strided_slice %65 {offsets = [0, 0], sizes = [8, 128], strides = [1, 1]} : vector<8x384xf32> to vector<8x128xf32>
    %69 = vector.extract_strided_slice %65 {offsets = [0, 128], sizes = [8, 128], strides = [1, 1]} : vector<8x384xf32> to vector<8x128xf32>
    %70 = vector.extract_strided_slice %65 {offsets = [0, 256], sizes = [8, 128], strides = [1, 1]} : vector<8x384xf32> to vector<8x128xf32>
    %71 = arith.mulf %69, %53 : vector<8x128xf32>
    %72 = arith.mulf %68, %67 : vector<8x128xf32>
    %73 = arith.addf %71, %72 : vector<8x128xf32>
    %74 = math.tanh %73 : vector<8x128xf32>
    %75 = arith.mulf %70, %74 : vector<8x128xf32>
    %76 = vector.broadcast %c1_i32 : i32 to vector<8x1xi32>
    %77 = arith.cmpi slt, %76, %20 : vector<8x1xi32>
    %78 = vector.shape_cast %77 : vector<8x1xi1> to vector<8x1xi1>
    %79 = vector.broadcast %78 : vector<8x1xi1> to vector<8x128xi1>
    %80 = arith.select %79, %75, %50 : vector<8x128xi1>, vector<8x128xf32>
    %81 = vector.shape_cast %77 : vector<8x1xi1> to vector<8x1xi1>
    %82 = vector.broadcast %81 : vector<8x1xi1> to vector<8x128xi1>
    %83 = arith.select %82, %73, %53 : vector<8x128xi1>, vector<8x128xf32>
    %c2_i32 = arith.constant 2 : i32
    %c8_i32_25 = arith.constant 8 : i32
    %84 = arith.muli %c2_i32, %c8_i32_25 : i32
    %85 = tpu.assume_multiple %84, 8 : i32
    %86 = arith.index_cast %85 : i32 to index
    %c0_26 = arith.constant 0 : index
    %87 = vector.load %arg9[%86, %c0_26] : memref<64x512xf32, #tpu.memory_space<vmem>>, vector<8x512xf32>
    %cst_27 = arith.constant dense<0.000000e+00> : vector<8x512xf32>
    %88 = tpu.matmul %80, %21, %cst_27 {dimension_numbers = #tpu.dot_dimension_numbers<[1], [0], [0], [1], [0, 0, 1, 1], [], []>} : vector<8x128xf32>, vector<128x512xf32>, vector<8x512xf32> -> vector<8x512xf32>
    %89 = arith.addf %87, %88 : vector<8x512xf32>
    %90 = vector.extract_strided_slice %89 {offsets = [0, 0], sizes = [8, 384], strides = [1, 1]} : vector<8x512xf32> to vector<8x384xf32>
    %91 = arith.negf %90 : vector<8x384xf32>
    %92 = math.exp %91 : vector<8x384xf32>
    %cst_28 = arith.constant 1.000000e+00 : f32
    %93 = vector.broadcast %cst_28 : f32 to vector<8x384xf32>
    %94 = arith.addf %93, %92 : vector<8x384xf32>
    %95 = arith.divf %93, %94 : vector<8x384xf32>
    %96 = vector.extract_strided_slice %89 {offsets = [0, 384], sizes = [8, 128], strides = [1, 1]} : vector<8x512xf32> to vector<8x128xf32>
    %97 = math.tanh %96 : vector<8x128xf32>
    %98 = vector.extract_strided_slice %95 {offsets = [0, 0], sizes = [8, 128], strides = [1, 1]} : vector<8x384xf32> to vector<8x128xf32>
    %99 = vector.extract_strided_slice %95 {offsets = [0, 128], sizes = [8, 128], strides = [1, 1]} : vector<8x384xf32> to vector<8x128xf32>
    %100 = vector.extract_strided_slice %95 {offsets = [0, 256], sizes = [8, 128], strides = [1, 1]} : vector<8x384xf32> to vector<8x128xf32>
    %101 = arith.mulf %99, %83 : vector<8x128xf32>
    %102 = arith.mulf %98, %97 : vector<8x128xf32>
    %103 = arith.addf %101, %102 : vector<8x128xf32>
    %104 = math.tanh %103 : vector<8x128xf32>
    %105 = arith.mulf %100, %104 : vector<8x128xf32>
    %106 = vector.broadcast %c2_i32 : i32 to vector<8x1xi32>
    %107 = arith.cmpi slt, %106, %20 : vector<8x1xi32>
    %108 = vector.shape_cast %107 : vector<8x1xi1> to vector<8x1xi1>
    %109 = vector.broadcast %108 : vector<8x1xi1> to vector<8x128xi1>
    %110 = arith.select %109, %105, %80 : vector<8x128xi1>, vector<8x128xf32>
    %111 = vector.shape_cast %107 : vector<8x1xi1> to vector<8x1xi1>
    %112 = vector.broadcast %111 : vector<8x1xi1> to vector<8x128xi1>
    %113 = arith.select %112, %103, %83 : vector<8x128xi1>, vector<8x128xf32>
    %c3_i32 = arith.constant 3 : i32
    %c8_i32_29 = arith.constant 8 : i32
    %114 = arith.muli %c3_i32, %c8_i32_29 : i32
    %115 = tpu.assume_multiple %114, 8 : i32
    %116 = arith.index_cast %115 : i32 to index
    %c0_30 = arith.constant 0 : index
    %117 = vector.load %arg9[%116, %c0_30] : memref<64x512xf32, #tpu.memory_space<vmem>>, vector<8x512xf32>
    %cst_31 = arith.constant dense<0.000000e+00> : vector<8x512xf32>
    %118 = tpu.matmul %110, %21, %cst_31 {dimension_numbers = #tpu.dot_dimension_numbers<[1], [0], [0], [1], [0, 0, 1, 1], [], []>} : vector<8x128xf32>, vector<128x512xf32>, vector<8x512xf32> -> vector<8x512xf32>
    %119 = arith.addf %117, %118 : vector<8x512xf32>
    %120 = vector.extract_strided_slice %119 {offsets = [0, 0], sizes = [8, 384], strides = [1, 1]} : vector<8x512xf32> to vector<8x384xf32>
    %121 = arith.negf %120 : vector<8x384xf32>
    %122 = math.exp %121 : vector<8x384xf32>
    %cst_32 = arith.constant 1.000000e+00 : f32
    %123 = vector.broadcast %cst_32 : f32 to vector<8x384xf32>
    %124 = arith.addf %123, %122 : vector<8x384xf32>
    %125 = arith.divf %123, %124 : vector<8x384xf32>
    %126 = vector.extract_strided_slice %119 {offsets = [0, 384], sizes = [8, 128], strides = [1, 1]} : vector<8x512xf32> to vector<8x128xf32>
    %127 = math.tanh %126 : vector<8x128xf32>
    %128 = vector.extract_strided_slice %125 {offsets = [0, 0], sizes = [8, 128], strides = [1, 1]} : vector<8x384xf32> to vector<8x128xf32>
    %129 = vector.extract_strided_slice %125 {offsets = [0, 128], sizes = [8, 128], strides = [1, 1]} : vector<8x384xf32> to vector<8x128xf32>
    %130 = vector.extract_strided_slice %125 {offsets = [0, 256], sizes = [8, 128], strides = [1, 1]} : vector<8x384xf32> to vector<8x128xf32>
    %131 = arith.mulf %129, %113 : vector<8x128xf32>
    %132 = arith.mulf %128, %127 : vector<8x128xf32>
    %133 = arith.addf %131, %132 : vector<8x128xf32>
    %134 = math.tanh %133 : vector<8x128xf32>
    %135 = arith.mulf %130, %134 : vector<8x128xf32>
    %136 = vector.broadcast %c3_i32 : i32 to vector<8x1xi32>
    %137 = arith.cmpi slt, %136, %20 : vector<8x1xi32>
    %138 = vector.shape_cast %137 : vector<8x1xi1> to vector<8x1xi1>
    %139 = vector.broadcast %138 : vector<8x1xi1> to vector<8x128xi1>
    %140 = arith.select %139, %135, %110 : vector<8x128xi1>, vector<8x128xf32>
    %141 = vector.shape_cast %137 : vector<8x1xi1> to vector<8x1xi1>
    %142 = vector.broadcast %141 : vector<8x1xi1> to vector<8x128xi1>
    %143 = arith.select %142, %133, %113 : vector<8x128xi1>, vector<8x128xf32>
    %c4_i32 = arith.constant 4 : i32
    %c8_i32_33 = arith.constant 8 : i32
    %144 = arith.muli %c4_i32, %c8_i32_33 : i32
    %145 = tpu.assume_multiple %144, 8 : i32
    %146 = arith.index_cast %145 : i32 to index
    %c0_34 = arith.constant 0 : index
    %147 = vector.load %arg9[%146, %c0_34] : memref<64x512xf32, #tpu.memory_space<vmem>>, vector<8x512xf32>
    %cst_35 = arith.constant dense<0.000000e+00> : vector<8x512xf32>
    %148 = tpu.matmul %140, %21, %cst_35 {dimension_numbers = #tpu.dot_dimension_numbers<[1], [0], [0], [1], [0, 0, 1, 1], [], []>} : vector<8x128xf32>, vector<128x512xf32>, vector<8x512xf32> -> vector<8x512xf32>
    %149 = arith.addf %147, %148 : vector<8x512xf32>
    %150 = vector.extract_strided_slice %149 {offsets = [0, 0], sizes = [8, 384], strides = [1, 1]} : vector<8x512xf32> to vector<8x384xf32>
    %151 = arith.negf %150 : vector<8x384xf32>
    %152 = math.exp %151 : vector<8x384xf32>
    %cst_36 = arith.constant 1.000000e+00 : f32
    %153 = vector.broadcast %cst_36 : f32 to vector<8x384xf32>
    %154 = arith.addf %153, %152 : vector<8x384xf32>
    %155 = arith.divf %153, %154 : vector<8x384xf32>
    %156 = vector.extract_strided_slice %149 {offsets = [0, 384], sizes = [8, 128], strides = [1, 1]} : vector<8x512xf32> to vector<8x128xf32>
    %157 = math.tanh %156 : vector<8x128xf32>
    %158 = vector.extract_strided_slice %155 {offsets = [0, 0], sizes = [8, 128], strides = [1, 1]} : vector<8x384xf32> to vector<8x128xf32>
    %159 = vector.extract_strided_slice %155 {offsets = [0, 128], sizes = [8, 128], strides = [1, 1]} : vector<8x384xf32> to vector<8x128xf32>
    %160 = vector.extract_strided_slice %155 {offsets = [0, 256], sizes = [8, 128], strides = [1, 1]} : vector<8x384xf32> to vector<8x128xf32>
    %161 = arith.mulf %159, %143 : vector<8x128xf32>
    %162 = arith.mulf %158, %157 : vector<8x128xf32>
    %163 = arith.addf %161, %162 : vector<8x128xf32>
    %164 = math.tanh %163 : vector<8x128xf32>
    %165 = arith.mulf %160, %164 : vector<8x128xf32>
    %166 = vector.broadcast %c4_i32 : i32 to vector<8x1xi32>
    %167 = arith.cmpi slt, %166, %20 : vector<8x1xi32>
    %168 = vector.shape_cast %167 : vector<8x1xi1> to vector<8x1xi1>
    %169 = vector.broadcast %168 : vector<8x1xi1> to vector<8x128xi1>
    %170 = arith.select %169, %165, %140 : vector<8x128xi1>, vector<8x128xf32>
    %171 = vector.shape_cast %167 : vector<8x1xi1> to vector<8x1xi1>
    %172 = vector.broadcast %171 : vector<8x1xi1> to vector<8x128xi1>
    %173 = arith.select %172, %163, %143 : vector<8x128xi1>, vector<8x128xf32>
    %c5_i32 = arith.constant 5 : i32
    %c8_i32_37 = arith.constant 8 : i32
    %174 = arith.muli %c5_i32, %c8_i32_37 : i32
    %175 = tpu.assume_multiple %174, 8 : i32
    %176 = arith.index_cast %175 : i32 to index
    %c0_38 = arith.constant 0 : index
    %177 = vector.load %arg9[%176, %c0_38] : memref<64x512xf32, #tpu.memory_space<vmem>>, vector<8x512xf32>
    %cst_39 = arith.constant dense<0.000000e+00> : vector<8x512xf32>
    %178 = tpu.matmul %170, %21, %cst_39 {dimension_numbers = #tpu.dot_dimension_numbers<[1], [0], [0], [1], [0, 0, 1, 1], [], []>} : vector<8x128xf32>, vector<128x512xf32>, vector<8x512xf32> -> vector<8x512xf32>
    %179 = arith.addf %177, %178 : vector<8x512xf32>
    %180 = vector.extract_strided_slice %179 {offsets = [0, 0], sizes = [8, 384], strides = [1, 1]} : vector<8x512xf32> to vector<8x384xf32>
    %181 = arith.negf %180 : vector<8x384xf32>
    %182 = math.exp %181 : vector<8x384xf32>
    %cst_40 = arith.constant 1.000000e+00 : f32
    %183 = vector.broadcast %cst_40 : f32 to vector<8x384xf32>
    %184 = arith.addf %183, %182 : vector<8x384xf32>
    %185 = arith.divf %183, %184 : vector<8x384xf32>
    %186 = vector.extract_strided_slice %179 {offsets = [0, 384], sizes = [8, 128], strides = [1, 1]} : vector<8x512xf32> to vector<8x128xf32>
    %187 = math.tanh %186 : vector<8x128xf32>
    %188 = vector.extract_strided_slice %185 {offsets = [0, 0], sizes = [8, 128], strides = [1, 1]} : vector<8x384xf32> to vector<8x128xf32>
    %189 = vector.extract_strided_slice %185 {offsets = [0, 128], sizes = [8, 128], strides = [1, 1]} : vector<8x384xf32> to vector<8x128xf32>
    %190 = vector.extract_strided_slice %185 {offsets = [0, 256], sizes = [8, 128], strides = [1, 1]} : vector<8x384xf32> to vector<8x128xf32>
    %191 = arith.mulf %189, %173 : vector<8x128xf32>
    %192 = arith.mulf %188, %187 : vector<8x128xf32>
    %193 = arith.addf %191, %192 : vector<8x128xf32>
    %194 = math.tanh %193 : vector<8x128xf32>
    %195 = arith.mulf %190, %194 : vector<8x128xf32>
    %196 = vector.broadcast %c5_i32 : i32 to vector<8x1xi32>
    %197 = arith.cmpi slt, %196, %20 : vector<8x1xi32>
    %198 = vector.shape_cast %197 : vector<8x1xi1> to vector<8x1xi1>
    %199 = vector.broadcast %198 : vector<8x1xi1> to vector<8x128xi1>
    %200 = arith.select %199, %195, %170 : vector<8x128xi1>, vector<8x128xf32>
    %201 = vector.shape_cast %197 : vector<8x1xi1> to vector<8x1xi1>
    %202 = vector.broadcast %201 : vector<8x1xi1> to vector<8x128xi1>
    %203 = arith.select %202, %193, %173 : vector<8x128xi1>, vector<8x128xf32>
    %c6_i32 = arith.constant 6 : i32
    %c8_i32_41 = arith.constant 8 : i32
    %204 = arith.muli %c6_i32, %c8_i32_41 : i32
    %205 = tpu.assume_multiple %204, 8 : i32
    %206 = arith.index_cast %205 : i32 to index
    %c0_42 = arith.constant 0 : index
    %207 = vector.load %arg9[%206, %c0_42] : memref<64x512xf32, #tpu.memory_space<vmem>>, vector<8x512xf32>
    %cst_43 = arith.constant dense<0.000000e+00> : vector<8x512xf32>
    %208 = tpu.matmul %200, %21, %cst_43 {dimension_numbers = #tpu.dot_dimension_numbers<[1], [0], [0], [1], [0, 0, 1, 1], [], []>} : vector<8x128xf32>, vector<128x512xf32>, vector<8x512xf32> -> vector<8x512xf32>
    %209 = arith.addf %207, %208 : vector<8x512xf32>
    %210 = vector.extract_strided_slice %209 {offsets = [0, 0], sizes = [8, 384], strides = [1, 1]} : vector<8x512xf32> to vector<8x384xf32>
    %211 = arith.negf %210 : vector<8x384xf32>
    %212 = math.exp %211 : vector<8x384xf32>
    %cst_44 = arith.constant 1.000000e+00 : f32
    %213 = vector.broadcast %cst_44 : f32 to vector<8x384xf32>
    %214 = arith.addf %213, %212 : vector<8x384xf32>
    %215 = arith.divf %213, %214 : vector<8x384xf32>
    %216 = vector.extract_strided_slice %209 {offsets = [0, 384], sizes = [8, 128], strides = [1, 1]} : vector<8x512xf32> to vector<8x128xf32>
    %217 = math.tanh %216 : vector<8x128xf32>
    %218 = vector.extract_strided_slice %215 {offsets = [0, 0], sizes = [8, 128], strides = [1, 1]} : vector<8x384xf32> to vector<8x128xf32>
    %219 = vector.extract_strided_slice %215 {offsets = [0, 128], sizes = [8, 128], strides = [1, 1]} : vector<8x384xf32> to vector<8x128xf32>
    %220 = vector.extract_strided_slice %215 {offsets = [0, 256], sizes = [8, 128], strides = [1, 1]} : vector<8x384xf32> to vector<8x128xf32>
    %221 = arith.mulf %219, %203 : vector<8x128xf32>
    %222 = arith.mulf %218, %217 : vector<8x128xf32>
    %223 = arith.addf %221, %222 : vector<8x128xf32>
    %224 = math.tanh %223 : vector<8x128xf32>
    %225 = arith.mulf %220, %224 : vector<8x128xf32>
    %226 = vector.broadcast %c6_i32 : i32 to vector<8x1xi32>
    %227 = arith.cmpi slt, %226, %20 : vector<8x1xi32>
    %228 = vector.shape_cast %227 : vector<8x1xi1> to vector<8x1xi1>
    %229 = vector.broadcast %228 : vector<8x1xi1> to vector<8x128xi1>
    %230 = arith.select %229, %225, %200 : vector<8x128xi1>, vector<8x128xf32>
    %231 = vector.shape_cast %227 : vector<8x1xi1> to vector<8x1xi1>
    %232 = vector.broadcast %231 : vector<8x1xi1> to vector<8x128xi1>
    %233 = arith.select %232, %223, %203 : vector<8x128xi1>, vector<8x128xf32>
    %c7_i32 = arith.constant 7 : i32
    %c8_i32_45 = arith.constant 8 : i32
    %234 = arith.muli %c7_i32, %c8_i32_45 : i32
    %235 = tpu.assume_multiple %234, 8 : i32
    %236 = arith.index_cast %235 : i32 to index
    %c0_46 = arith.constant 0 : index
    %237 = vector.load %arg9[%236, %c0_46] : memref<64x512xf32, #tpu.memory_space<vmem>>, vector<8x512xf32>
    %cst_47 = arith.constant dense<0.000000e+00> : vector<8x512xf32>
    %238 = tpu.matmul %230, %21, %cst_47 {dimension_numbers = #tpu.dot_dimension_numbers<[1], [0], [0], [1], [0, 0, 1, 1], [], []>} : vector<8x128xf32>, vector<128x512xf32>, vector<8x512xf32> -> vector<8x512xf32>
    %239 = arith.addf %237, %238 : vector<8x512xf32>
    %240 = vector.extract_strided_slice %239 {offsets = [0, 0], sizes = [8, 384], strides = [1, 1]} : vector<8x512xf32> to vector<8x384xf32>
    %241 = arith.negf %240 : vector<8x384xf32>
    %242 = math.exp %241 : vector<8x384xf32>
    %cst_48 = arith.constant 1.000000e+00 : f32
    %243 = vector.broadcast %cst_48 : f32 to vector<8x384xf32>
    %244 = arith.addf %243, %242 : vector<8x384xf32>
    %245 = arith.divf %243, %244 : vector<8x384xf32>
    %246 = vector.extract_strided_slice %239 {offsets = [0, 384], sizes = [8, 128], strides = [1, 1]} : vector<8x512xf32> to vector<8x128xf32>
    %247 = math.tanh %246 : vector<8x128xf32>
    %248 = vector.extract_strided_slice %245 {offsets = [0, 0], sizes = [8, 128], strides = [1, 1]} : vector<8x384xf32> to vector<8x128xf32>
    %249 = vector.extract_strided_slice %245 {offsets = [0, 128], sizes = [8, 128], strides = [1, 1]} : vector<8x384xf32> to vector<8x128xf32>
    %250 = vector.extract_strided_slice %245 {offsets = [0, 256], sizes = [8, 128], strides = [1, 1]} : vector<8x384xf32> to vector<8x128xf32>
    %251 = arith.mulf %249, %233 : vector<8x128xf32>
    %252 = arith.mulf %248, %247 : vector<8x128xf32>
    %253 = arith.addf %251, %252 : vector<8x128xf32>
    %254 = math.tanh %253 : vector<8x128xf32>
    %255 = arith.mulf %250, %254 : vector<8x128xf32>
    %256 = vector.broadcast %c7_i32 : i32 to vector<8x1xi32>
    %257 = arith.cmpi slt, %256, %20 : vector<8x1xi32>
    %258 = vector.shape_cast %257 : vector<8x1xi1> to vector<8x1xi1>
    %259 = vector.broadcast %258 : vector<8x1xi1> to vector<8x128xi1>
    %260 = arith.select %259, %255, %230 : vector<8x128xi1>, vector<8x128xf32>
    %261 = vector.shape_cast %257 : vector<8x1xi1> to vector<8x1xi1>
    %262 = vector.broadcast %261 : vector<8x1xi1> to vector<8x128xi1>
    %263 = arith.select %262, %253, %233 : vector<8x128xi1>, vector<8x128xf32>
    %c8_i32_49 = arith.constant 8 : i32
    %c0_50 = arith.constant 0 : index
    %c0_51 = arith.constant 0 : index
    %264 = vector.load %arg8[%c0_50, %c0_51] : memref<8x128xf32, #tpu.memory_space<vmem>>, vector<8x128xf32>
    tpu.vector_store %arg8[%c0_50, %c0_51], %260 {strides = array<i32>} : memref<8x128xf32, #tpu.memory_space<vmem>>, vector<8x128xf32>,
    return
  }
  func.func @transform_0(%arg0: i32) -> (i32, i32) {
    %c0_i32 = arith.constant 0 : i32
    %c0_i32_0 = arith.constant 0 : i32
    return %arg0, %c0_i32 : i32, i32
  }
  func.func @transform_1(%arg0: i32) -> (i32, i32) {
    %c0_i32 = arith.constant 0 : i32
    %c0_i32_0 = arith.constant 0 : i32
    return %arg0, %c0_i32 : i32, i32
  }
  func.func @transform_2(%arg0: i32) -> (i32, i32) {
    %c0_i32 = arith.constant 0 : i32
    %c0_i32_0 = arith.constant 0 : i32
    return %arg0, %c0_i32 : i32, i32
  }
  func.func @transform_3(%arg0: i32) -> (i32, i32) {
    %c0_i32 = arith.constant 0 : i32
    %c0_i32_0 = arith.constant 0 : i32
    %c0_i32_1 = arith.constant 0 : i32
    return %c0_i32, %c0_i32_0 : i32, i32
  }
  func.func @transform_4(%arg0: i32) -> (i32, i32) {
    %c0_i32 = arith.constant 0 : i32
    %c0_i32_0 = arith.constant 0 : i32
    %c0_i32_1 = arith.constant 0 : i32
    return %c0_i32, %c0_i32_0 : i32, i32
  }
  func.func @transform_5(%arg0: i32) -> (i32, i32) {
    %c0_i32 = arith.constant 0 : i32
    %c0_i32_0 = arith.constant 0 : i32
    %c0_i32_1 = arith.constant 0 : i32
    return %c0_i32, %c0_i32_0 : i32, i32
  }
  func.func @transform_6(%arg0: i32) -> (i32, i32) {
    %c0_i32 = arith.constant 0 : i32
    %c0_i32_0 = arith.constant 0 : i32
    %c0_i32_1 = arith.constant 0 : i32
    return %c0_i32, %c0_i32_0 : i32, i32
  }
  func.func @transform_7(%arg0: i32) -> (i32, i32) {
    %c0_i32 = arith.constant 0 : i32
    %c0_i32_0 = arith.constant 0 : i32
    return %arg0, %c0_i32 : i32, i32
  }
}

</mosaic_0001>

<llo_original>
// kernel: char_lstm_embedding.1
$region0: #{char_lstm_embedding.1}
  #allocation0 [shape = 'u32[]', space=smem, size = 0x4, offset = 0x4, fixed_abs, tag = 'smem constant byte address 0x4 - core index']
  #allocation1 [shape = 'u32[72,128]{1,0:T(1,128)}', space=vmem, size = 0x9000, scoped, tag = 'internal scratch']
  #allocation2 [shape = 'f32[64,512]{1,0:T(8,128)}', space=vmem, size = 0x20000, scoped, tag = 'scratch operand']
  %s0 = inlined_call_operand.vmem [shape: s32[8,1], index: 0, kind: input, shape index: {}]
  %s1 = inlined_call_operand.vmem [shape: s32[64,1], index: 1, kind: input, shape index: {}]
  %s2 = inlined_call_operand.vmem [shape: s32[64,1], index: 2, kind: input, shape index: {}]
  %s3 = inlined_call_operand.vmem [shape: f32[128,512], index: 3, kind: input, shape index: {}]
  %s4 = inlined_call_operand.vmem [shape: f32[128,512], index: 4, kind: input, shape index: {}]
  %s5 = inlined_call_operand.vmem [shape: f32[1,512], index: 5, kind: input, shape index: {}]
  %s6 = inlined_call_operand.vmem [shape: f32[128,512], index: 6, kind: input, shape index: {}]
  %s7 = inlined_call_operand.vmem [shape: f32[8,128], index: 7, kind: output, shape index: {}]
  %s8 = sld [smem:[#allocation0]]
  $region38: #{char_lstm_embedding.1} parent=0
    _
  %s10 = ssub.s32 1, %s8
  %s11 = scalar_select 0, %s10, %s8
  // Predicated region
  $region2: #{char_lstm_embedding.1} parent=0 // pred_check
    _
  $region3: #{char_lstm_embedding.1} parent=0 // pred_check_branch
    %13 = sbr.rel (0) target = $region5
  $region4: #{char_lstm_embedding.1} parent=0 // pred_region
    _
  $region5: #{char_lstm_embedding.1} parent=0 // pred_fallthru
    _
  // Predicated region
  $region6: #{char_lstm_embedding.1} parent=0 // pred_check
    _
  $region7: #{char_lstm_embedding.1} parent=0 // pred_check_branch
    %15 = sbr.rel (0) target = $region9
  $region8: #{char_lstm_embedding.1} parent=0 // pred_region
    _
  $region9: #{char_lstm_embedding.1} parent=0 // pred_fallthru
    _
  // Predicated region
  $region10: #{char_lstm_embedding.1} parent=0 // pred_check
    _
  $region11: #{char_lstm_embedding.1} parent=0 // pred_check_branch
    %17 = sbr.rel (0) target = $region13
  $region12: #{char_lstm_embedding.1} parent=0 // pred_region
    _
  $region13: #{char_lstm_embedding.1} parent=0 // pred_fallthru
    _
  // Predicated region
  $region14: #{char_lstm_embedding.1} parent=0 // pred_check
    _
  $region15: #{char_lstm_embedding.1} parent=0 // pred_check_branch
    %19 = sbr.rel (0) target = $region17
  $region16: #{char_lstm_embedding.1} parent=0 // pred_region
    _
  $region17: #{char_lstm_embedding.1} parent=0 // pred_fallthru
    _
  // Predicated region
  $region18: #{char_lstm_embedding.1} parent=0 // pred_check
    _
  $region19: #{char_lstm_embedding.1} parent=0 // pred_check_branch
    %21 = sbr.rel (0) target = $region21
  $region20: #{char_lstm_embedding.1} parent=0 // pred_region
    _
  $region21: #{char_lstm_embedding.1} parent=0 // pred_fallthru
    _
  // Predicated region
  $region22: #{char_lstm_embedding.1} parent=0 // pred_check
    _
  $region23: #{char_lstm_embedding.1} parent=0 // pred_check_branch
    %23 = sbr.rel (0) target = $region25
  $region24: #{char_lstm_embedding.1} parent=0 // pred_region
    _
  $region25: #{char_lstm_embedding.1} parent=0 // pred_fallthru
    _
  // Predicated region
  $region26: #{char_lstm_embedding.1} parent=0 // pred_check
    _
  $region27: #{char_lstm_embedding.1} parent=0 // pred_check_branch
    %25 = sbr.rel (0) target = $region29
  $region28: #{char_lstm_embedding.1} parent=0 // pred_region
    _
  $region29: #{char_lstm_embedding.1} parent=0 // pred_fallthru
    _
  %v26 = vlaneseq
  %v27 = vand.u32 %v26, 127
  %v28 = vld [vmem:[%s1] sm:$0xff]
  %v29 = vld [vmem:[%s1 + $0x8] sm:$0xff]
  %v30 = vld [vmem:[%s1 + $0x10] sm:$0xff]
  %v31 = vld [vmem:[%s1 + $0x18] sm:$0xff]
  %v32 = vld [vmem:[%s1 + $0x20] sm:$0xff]
  %v33 = vld [vmem:[%s1 + $0x28] sm:$0xff]
  %v34 = vld [vmem:[%s1 + $0x30] sm:$0xff]
  %v35 = vld [vmem:[%s1 + $0x38] sm:$0xff]
  %36 = vset.pattern.permute.xlu0 0
  %37 = vperm.xlu0 %36, %v28
  %v38 = vpop.permute.xlu0 %37
  %39 = vset.pattern.permute.xlu0 0
  %40 = vperm.xlu0 %39, %v29
  %v41 = vpop.permute.xlu0 %40
  %42 = vset.pattern.permute.xlu0 0
  %43 = vperm.xlu0 %42, %v30
  %v44 = vpop.permute.xlu0 %43
  %45 = vset.pattern.permute.xlu0 0
  %46 = vperm.xlu0 %45, %v31
  %v47 = vpop.permute.xlu0 %46
  %48 = vset.pattern.permute.xlu0 0
  %49 = vperm.xlu0 %48, %v32
  %v50 = vpop.permute.xlu0 %49
  %51 = vset.pattern.permute.xlu0 0
  %52 = vperm.xlu0 %51, %v33
  %v53 = vpop.permute.xlu0 %52
  %54 = vset.pattern.permute.xlu0 0
  %55 = vperm.xlu0 %54, %v34
  %v56 = vpop.permute.xlu0 %55
  %57 = vset.pattern.permute.xlu0 0
  %58 = vperm.xlu0 %57, %v35
  %v59 = vpop.permute.xlu0 %58
  %vm60 = vcmp.eq.s32.totalorder %v27, %v38
  %vm61 = vcmp.eq.s32.totalorder %v27, %v41
  %vm62 = vcmp.eq.s32.totalorder %v27, %v44
  %vm63 = vcmp.eq.s32.totalorder %v27, %v47
  %vm64 = vcmp.eq.s32.totalorder %v27, %v50
  %vm65 = vcmp.eq.s32.totalorder %v27, %v53
  %vm66 = vcmp.eq.s32.totalorder %v27, %v56
  %vm67 = vcmp.eq.s32.totalorder %v27, %v59
  %v68 = vsel %vm60, 1, 0
  %v69 = vsel %vm61, 1, 0
  %v70 = vsel %vm62, 1, 0
  %v71 = vsel %vm63, 1, 0
  %v72 = vsel %vm64, 1, 0
  %v73 = vsel %vm65, 1, 0
  %v74 = vsel %vm66, 1, 0
  %v75 = vsel %vm67, 1, 0
  %v76 = vcvt.s32.f32 %v68
  %v77 = vcvt.s32.f32 %v69
  %v78 = vcvt.s32.f32 %v70
  %v79 = vcvt.s32.f32 %v71
  %v80 = vcvt.s32.f32 %v72
  %v81 = vcvt.s32.f32 %v73
  %v82 = vcvt.s32.f32 %v74
  %v83 = vcvt.s32.f32 %v75
  %v84 = vld [vmem:[%s2] sm:$0xff]
  %v85 = vld [vmem:[%s2 + $0x8] sm:$0xff]
  %v86 = vld [vmem:[%s2 + $0x10] sm:$0xff]
  %v87 = vld [vmem:[%s2 + $0x18] sm:$0xff]
  %v88 = vld [vmem:[%s2 + $0x20] sm:$0xff]
  %v89 = vld [vmem:[%s2 + $0x28] sm:$0xff]
  %v90 = vld [vmem:[%s2 + $0x30] sm:$0xff]
  %v91 = vld [vmem:[%s2 + $0x38] sm:$0xff]
  %92 = vset.pattern.permute.xlu0 0
  %93 = vperm.xlu0 %92, %v84
  %v94 = vpop.permute.xlu0 %93
  %95 = vset.pattern.permute.xlu0 0
  %96 = vperm.xlu0 %95, %v85
  %v97 = vpop.permute.xlu0 %96
  %98 = vset.pattern.permute.xlu0 0
  %99 = vperm.xlu0 %98, %v86
  %v100 = vpop.permute.xlu0 %99
  %101 = vset.pattern.permute.xlu0 0
  %102 = vperm.xlu0 %101, %v87
  %v103 = vpop.permute.xlu0 %102
  %104 = vset.pattern.permute.xlu0 0
  %105 = vperm.xlu0 %104, %v88
  %v106 = vpop.permute.xlu0 %105
  %107 = vset.pattern.permute.xlu0 0
  %108 = vperm.xlu0 %107, %v89
  %v109 = vpop.permute.xlu0 %108
  %110 = vset.pattern.permute.xlu0 0
  %111 = vperm.xlu0 %110, %v90
  %v112 = vpop.permute.xlu0 %111
  %113 = vset.pattern.permute.xlu0 0
  %114 = vperm.xlu0 %113, %v91
  %v115 = vpop.permute.xlu0 %114
  %vm116 = vcmp.eq.s32.totalorder %v27, %v94
  %vm117 = vcmp.eq.s32.totalorder %v27, %v97
  %vm118 = vcmp.eq.s32.totalorder %v27, %v100
  %vm119 = vcmp.eq.s32.totalorder %v27, %v103
  %vm120 = vcmp.eq.s32.totalorder %v27, %v106
  %vm121 = vcmp.eq.s32.totalorder %v27, %v109
  %vm122 = vcmp.eq.s32.totalorder %v27, %v112
  %vm123 = vcmp.eq.s32.totalorder %v27, %v115
  %v124 = vsel %vm116, 1, 0
  %v125 = vsel %vm117, 1, 0
  %v126 = vsel %vm118, 1, 0
  %v127 = vsel %vm119, 1, 0
  %v128 = vsel %vm120, 1, 0
  %v129 = vsel %vm121, 1, 0
  %v130 = vsel %vm122, 1, 0
  %v131 = vsel %vm123, 1, 0
  %v132 = vcvt.s32.f32 %v124
  %v133 = vcvt.s32.f32 %v125
  %v134 = vcvt.s32.f32 %v126
  %v135 = vcvt.s32.f32 %v127
  %v136 = vcvt.s32.f32 %v128
  %v137 = vcvt.s32.f32 %v129
  %v138 = vcvt.s32.f32 %v130
  %v139 = vcvt.s32.f32 %v131
  %v140 = vld [vmem:[%s3] sm:$0xff]
  %v141 = vld [vmem:[%s3 + $0x8] sm:$0xff]
  %v142 = vld [vmem:[%s3 + $0x10] sm:$0xff]
  %v143 = vld [vmem:[%s3 + $0x18] sm:$0xff]
  %v144 = vld [vmem:[%s3 + $0x20] sm:$0xff]
  %v145 = vld [vmem:[%s3 + $0x28] sm:$0xff]
  %v146 = vld [vmem:[%s3 + $0x30] sm:$0xff]
  %v147 = vld [vmem:[%s3 + $0x38] sm:$0xff]
  %v148 = vld [vmem:[%s3 + $0x40] sm:$0xff]
  %v149 = vld [vmem:[%s3 + $0x48] sm:$0xff]
  %v150 = vld [vmem:[%s3 + $0x50] sm:$0xff]
  %v151 = vld [vmem:[%s3 + $0x58] sm:$0xff]
  %v152 = vld [vmem:[%s3 + $0x60] sm:$0xff]
  %v153 = vld [vmem:[%s3 + $0x68] sm:$0xff]
  %v154 = vld [vmem:[%s3 + $0x70] sm:$0xff]
  %v155 = vld [vmem:[%s3 + $0x78] sm:$0xff]
  %v156 = vld [vmem:[%s3 + $0x80] sm:$0xff]
  %v157 = vld [vmem:[%s3 + $0x88] sm:$0xff]
  %v158 = vld [vmem:[%s3 + $0x90] sm:$0xff]
  %v159 = vld [vmem:[%s3 + $0x98] sm:$0xff]
  %v160 = vld [vmem:[%s3 + $0xa0] sm:$0xff]
  %v161 = vld [vmem:[%s3 + $0xa8] sm:$0xff]
  %v162 = vld [vmem:[%s3 + $0xb0] sm:$0xff]
  %v163 = vld [vmem:[%s3 + $0xb8] sm:$0xff]
  %v164 = vld [vmem:[%s3 + $0xc0] sm:$0xff]
  %v165 = vld [vmem:[%s3 + $0xc8] sm:$0xff]
  %v166 = vld [vmem:[%s3 + $0xd0] sm:$0xff]
  %v167 = vld [vmem:[%s3 + $0xd8] sm:$0xff]
  %v168 = vld [vmem:[%s3 + $0xe0] sm:$0xff]
  %v169 = vld [vmem:[%s3 + $0xe8] sm:$0xff]
  %v170 = vld [vmem:[%s3 + $0xf0] sm:$0xff]
  %v171 = vld [vmem:[%s3 + $0xf8] sm:$0xff]
  %v172 = vld [vmem:[%s3 + $0x100] sm:$0xff]
  %v173 = vld [vmem:[%s3 + $0x108] sm:$0xff]
  %v174 = vld [vmem:[%s3 + $0x110] sm:$0xff]
  %v175 = vld [vmem:[%s3 + $0x118] sm:$0xff]
  %v176 = vld [vmem:[%s3 + $0x120] sm:$0xff]
  %v177 = vld [vmem:[%s3 + $0x128] sm:$0xff]
  %v178 = vld [vmem:[%s3 + $0x130] sm:$0xff]
  %v179 = vld [vmem:[%s3 + $0x138] sm:$0xff]
  %v180 = vld [vmem:[%s3 + $0x140] sm:$0xff]
  %v181 = vld [vmem:[%s3 + $0x148] sm:$0xff]
  %v182 = vld [vmem:[%s3 + $0x150] sm:$0xff]
  %v183 = vld [vmem:[%s3 + $0x158] sm:$0xff]
  %v184 = vld [vmem:[%s3 + $0x160] sm:$0xff]
  %v185 = vld [vmem:[%s3 + $0x168] sm:$0xff]
  %v186 = vld [vmem:[%s3 + $0x170] sm:$0xff]
  %v187 = vld [vmem:[%s3 + $0x178] sm:$0xff]
  %v188 = vld [vmem:[%s3 + $0x180] sm:$0xff]
  %v189 = vld [vmem:[%s3 + $0x188] sm:$0xff]
  %v190 = vld [vmem:[%s3 + $0x190] sm:$0xff]
  %v191 = vld [vmem:[%s3 + $0x198] sm:$0xff]
  %v192 = vld [vmem:[%s3 + $0x1a0] sm:$0xff]
  %v193 = vld [vmem:[%s3 + $0x1a8] sm:$0xff]
  %v194 = vld [vmem:[%s3 + $0x1b0] sm:$0xff]
  %v195 = vld [vmem:[%s3 + $0x1b8] sm:$0xff]
  %v196 = vld [vmem:[%s3 + $0x1c0] sm:$0xff]
  %v197 = vld [vmem:[%s3 + $0x1c8] sm:$0xff]
  %v198 = vld [vmem:[%s3 + $0x1d0] sm:$0xff]
  %v199 = vld [vmem:[%s3 + $0x1d8] sm:$0xff]
  %v200 = vld [vmem:[%s3 + $0x1e0] sm:$0xff]
  %v201 = vld [vmem:[%s3 + $0x1e8] sm:$0xff]
  %v202 = vld [vmem:[%s3 + $0x1f0] sm:$0xff]
  %v203 = vld [vmem:[%s3 + $0x1f8] sm:$0xff]
  %v204 = vld [vmem:[%s4] sm:$0xff]
  %v205 = vld [vmem:[%s4 + $0x8] sm:$0xff]
  %v206 = vld [vmem:[%s4 + $0x10] sm:$0xff]
  %v207 = vld [vmem:[%s4 + $0x18] sm:$0xff]
  %v208 = vld [vmem:[%s4 + $0x20] sm:$0xff]
  %v209 = vld [vmem:[%s4 + $0x28] sm:$0xff]
  %v210 = vld [vmem:[%s4 + $0x30] sm:$0xff]
  %v211 = vld [vmem:[%s4 + $0x38] sm:$0xff]
  %v212 = vld [vmem:[%s4 + $0x40] sm:$0xff]
  %v213 = vld [vmem:[%s4 + $0x48] sm:$0xff]
  %v214 = vld [vmem:[%s4 + $0x50] sm:$0xff]
  %v215 = vld [vmem:[%s4 + $0x58] sm:$0xff]
  %v216 = vld [vmem:[%s4 + $0x60] sm:$0xff]
  %v217 = vld [vmem:[%s4 + $0x68] sm:$0xff]
  %v218 = vld [vmem:[%s4 + $0x70] sm:$0xff]
  %v219 = vld [vmem:[%s4 + $0x78] sm:$0xff]
  %v220 = vld [vmem:[%s4 + $0x80] sm:$0xff]
  %v221 = vld [vmem:[%s4 + $0x88] sm:$0xff]
  %v222 = vld [vmem:[%s4 + $0x90] sm:$0xff]
  %v223 = vld [vmem:[%s4 + $0x98] sm:$0xff]
  %v224 = vld [vmem:[%s4 + $0xa0] sm:$0xff]
  %v225 = vld [vmem:[%s4 + $0xa8] sm:$0xff]
  %v226 = vld [vmem:[%s4 + $0xb0] sm:$0xff]
  %v227 = vld [vmem:[%s4 + $0xb8] sm:$0xff]
  %v228 = vld [vmem:[%s4 + $0xc0] sm:$0xff]
  %v229 = vld [vmem:[%s4 + $0xc8] sm:$0xff]
  %v230 = vld [vmem:[%s4 + $0xd0] sm:$0xff]
  %v231 = vld [vmem:[%s4 + $0xd8] sm:$0xff]
  %v232 = vld [vmem:[%s4 + $0xe0] sm:$0xff]
  %v233 = vld [vmem:[%s4 + $0xe8] sm:$0xff]
  %v234 = vld [vmem:[%s4 + $0xf0] sm:$0xff]
  %v235 = vld [vmem:[%s4 + $0xf8] sm:$0xff]
  %v236 = vld [vmem:[%s4 + $0x100] sm:$0xff]
  %v237 = vld [vmem:[%s4 + $0x108] sm:$0xff]
  %v238 = vld [vmem:[%s4 + $0x110] sm:$0xff]
  %v239 = vld [vmem:[%s4 + $0x118] sm:$0xff]
  %v240 = vld [vmem:[%s4 + $0x120] sm:$0xff]
  %v241 = vld [vmem:[%s4 + $0x128] sm:$0xff]
  %v242 = vld [vmem:[%s4 + $0x130] sm:$0xff]
  %v243 = vld [vmem:[%s4 + $0x138] sm:$0xff]
  %v244 = vld [vmem:[%s4 + $0x140] sm:$0xff]
  %v245 = vld [vmem:[%s4 + $0x148] sm:$0xff]
  %v246 = vld [vmem:[%s4 + $0x150] sm:$0xff]
  %v247 = vld [vmem:[%s4 + $0x158] sm:$0xff]
  %v248 = vld [vmem:[%s4 + $0x160] sm:$0xff]
  %v249 = vld [vmem:[%s4 + $0x168] sm:$0xff]
  %v250 = vld [vmem:[%s4 + $0x170] sm:$0xff]
  %v251 = vld [vmem:[%s4 + $0x178] sm:$0xff]
  %v252 = vld [vmem:[%s4 + $0x180] sm:$0xff]
  %v253 = vld [vmem:[%s4 + $0x188] sm:$0xff]
  %v254 = vld [vmem:[%s4 + $0x190] sm:$0xff]
  %v255 = vld [vmem:[%s4 + $0x198] sm:$0xff]
  %v256 = vld [vmem:[%s4 + $0x1a0] sm:$0xff]
  %v257 = vld [vmem:[%s4 + $0x1a8] sm:$0xff]
  %v258 = vld [vmem:[%s4 + $0x1b0] sm:$0xff]
  %v259 = vld [vmem:[%s4 + $0x1b8] sm:$0xff]
  %v260 = vld [vmem:[%s4 + $0x1c0] sm:$0xff]
  %v261 = vld [vmem:[%s4 + $0x1c8] sm:$0xff]
  %v262 = vld [vmem:[%s4 + $0x1d0] sm:$0xff]
  %v263 = vld [vmem:[%s4 + $0x1d8] sm:$0xff]
  %v264 = vld [vmem:[%s4 + $0x1e0] sm:$0xff]
  %v265 = vld [vmem:[%s4 + $0x1e8] sm:$0xff]
  %v266 = vld [vmem:[%s4 + $0x1f0] sm:$0xff]
  %v267 = vld [vmem:[%s4 + $0x1f8] sm:$0xff]
  %268 = vmatpush.msra.mxu0 %v264
  %269 = vmatpush.msra.mxu0 %v260
  %270 = vmatpush.msra.mxu0 %v256
  %271 = vmatpush.msra.mxu0 %v252
  %272 = vmatpush.msra.mxu0 %v248
  %273 = vmatpush.msra.mxu0 %v244
  %274 = vmatpush.msra.mxu0 %v240
  %275 = vmatpush.msra.mxu0 %v236
  %276 = vmatpush.msra.mxu0 %v232
  %277 = vmatpush.msra.mxu0 %v228
  %278 = vmatpush.msra.mxu0 %v224
  %279 = vmatpush.msra.mxu0 %v220
  %280 = vmatpush.msra.mxu0 %v216
  %281 = vmatpush.msra.mxu0 %v212
  %282 = vmatpush.msra.mxu0 %v208
  %283 = vmatpush.msra.mxu0 %v204
  %284 = vmatmul.f32.gmra.mxu0 %v132
  %v285 = vpop.f32.mrf.mxu0
  %v286 = vadd.f32 0.0, %v285
  %287 = vmatmul.f32.gmra.mxu0 %v133
  %v288 = vpop.f32.mrf.mxu0
  %v289 = vadd.f32 0.0, %v288
  %290 = vmatmul.f32.gmra.mxu0 %v134
  %v291 = vpop.f32.mrf.mxu0
  %v292 = vadd.f32 0.0, %v291
  %293 = vmatmul.f32.gmra.mxu0 %v135
  %v294 = vpop.f32.mrf.mxu0
  %v295 = vadd.f32 0.0, %v294
  %296 = vmatmul.f32.gmra.mxu0 %v136
  %v297 = vpop.f32.mrf.mxu0
  %v298 = vadd.f32 0.0, %v297
  %299 = vmatmul.f32.gmra.mxu0 %v137
  %v300 = vpop.f32.mrf.mxu0
  %v301 = vadd.f32 0.0, %v300
  %302 = vmatmul.f32.gmra.mxu0 %v138
  %v303 = vpop.f32.mrf.mxu0
  %v304 = vadd.f32 0.0, %v303
  %305 = vmatmul.f32.gmra.mxu0 %v139
  %v306 = vpop.f32.mrf.mxu0
  %v307 = vadd.f32 0.0, %v306
  %308 = vdwg.mxu0
  %309 = vmatpush.msra.mxu0 %v265
  %310 = vmatpush.msra.mxu0 %v261
  %311 = vmatpush.msra.mxu0 %v257
  %312 = vmatpush.msra.mxu0 %v253
  %313 = vmatpush.msra.mxu0 %v249
  %314 = vmatpush.msra.mxu0 %v245
  %315 = vmatpush.msra.mxu0 %v241
  %316 = vmatpush.msra.mxu0 %v237
  %317 = vmatpush.msra.mxu0 %v233
  %318 = vmatpush.msra.mxu0 %v229
  %319 = vmatpush.msra.mxu0 %v225
  %320 = vmatpush.msra.mxu0 %v221
  %321 = vmatpush.msra.mxu0 %v217
  %322 = vmatpush.msra.mxu0 %v213
  %323 = vmatpush.msra.mxu0 %v209
  %324 = vmatpush.msra.mxu0 %v205
  %325 = vmatmul.f32.gmra.mxu0 %v132
  %v326 = vpop.f32.mrf.mxu0
  %v327 = vadd.f32 0.0, %v326
  %328 = vmatmul.f32.gmra.mxu0 %v133
  %v329 = vpop.f32.mrf.mxu0
  %v330 = vadd.f32 0.0, %v329
  %331 = vmatmul.f32.gmra.mxu0 %v134
  %v332 = vpop.f32.mrf.mxu0
  %v333 = vadd.f32 0.0, %v332
  %334 = vmatmul.f32.gmra.mxu0 %v135
  %v335 = vpop.f32.mrf.mxu0
  %v336 = vadd.f32 0.0, %v335
  %337 = vmatmul.f32.gmra.mxu0 %v136
  %v338 = vpop.f32.mrf.mxu0
  %v339 = vadd.f32 0.0, %v338
  %340 = vmatmul.f32.gmra.mxu0 %v137
  %v341 = vpop.f32.mrf.mxu0
  %v342 = vadd.f32 0.0, %v341
  %343 = vmatmul.f32.gmra.mxu0 %v138
  %v344 = vpop.f32.mrf.mxu0
  %v345 = vadd.f32 0.0, %v344
  %346 = vmatmul.f32.gmra.mxu0 %v139
  %v347 = vpop.f32.mrf.mxu0
  %v348 = vadd.f32 0.0, %v347
  %349 = vdwg.mxu0
  %350 = vmatpush.msra.mxu0 %v266
  %351 = vmatpush.msra.mxu0 %v262
  %352 = vmatpush.msra.mxu0 %v258
  %353 = vmatpush.msra.mxu0 %v254
  %354 = vmatpush.msra.mxu0 %v250
  %355 = vmatpush.msra.mxu0 %v246
  %356 = vmatpush.msra.mxu0 %v242
  %357 = vmatpush.msra.mxu0 %v238
  %358 = vmatpush.msra.mxu0 %v234
  %359 = vmatpush.msra.mxu0 %v230
  %360 = vmatpush.msra.mxu0 %v226
  %361 = vmatpush.msra.mxu0 %v222
  %362 = vmatpush.msra.mxu0 %v218
  %363 = vmatpush.msra.mxu0 %v214
  %364 = vmatpush.msra.mxu0 %v210
  %365 = vmatpush.msra.mxu0 %v206
  %366 = vmatmul.f32.gmra.mxu0 %v132
  %v367 = vpop.f32.mrf.mxu0
  %v368 = vadd.f32 0.0, %v367
  %369 = vmatmul.f32.gmra.mxu0 %v133
  %v370 = vpop.f32.mrf.mxu0
  %v371 = vadd.f32 0.0, %v370
  %372 = vmatmul.f32.gmra.mxu0 %v134
  %v373 = vpop.f32.mrf.mxu0
  %v374 = vadd.f32 0.0, %v373
  %375 = vmatmul.f32.gmra.mxu0 %v135
  %v376 = vpop.f32.mrf.mxu0
  %v377 = vadd.f32 0.0, %v376
  %378 = vmatmul.f32.gmra.mxu0 %v136
  %v379 = vpop.f32.mrf.mxu0
  %v380 = vadd.f32 0.0, %v379
  %381 = vmatmul.f32.gmra.mxu0 %v137
  %v382 = vpop.f32.mrf.mxu0
  %v383 = vadd.f32 0.0, %v382
  %384 = vmatmul.f32.gmra.mxu0 %v138
  %v385 = vpop.f32.mrf.mxu0
  %v386 = vadd.f32 0.0, %v385
  %387 = vmatmul.f32.gmra.mxu0 %v139
  %v388 = vpop.f32.mrf.mxu0
  %v389 = vadd.f32 0.0, %v388
  %390 = vdwg.mxu0
  %391 = vmatpush.msra.mxu0 %v267
  %392 = vmatpush.msra.mxu0 %v263
  %393 = vmatpush.msra.mxu0 %v259
  %394 = vmatpush.msra.mxu0 %v255
  %395 = vmatpush.msra.mxu0 %v251
  %396 = vmatpush.msra.mxu0 %v247
  %397 = vmatpush.msra.mxu0 %v243
  %398 = vmatpush.msra.mxu0 %v239
  %399 = vmatpush.msra.mxu0 %v235
  %400 = vmatpush.msra.mxu0 %v231
  %401 = vmatpush.msra.mxu0 %v227
  %402 = vmatpush.msra.mxu0 %v223
  %403 = vmatpush.msra.mxu0 %v219
  %404 = vmatpush.msra.mxu0 %v215
  %405 = vmatpush.msra.mxu0 %v211
  %406 = vmatpush.msra.mxu0 %v207
  %407 = vmatmul.f32.gmra.mxu0 %v132
  %v408 = vpop.f32.mrf.mxu0
  %v409 = vadd.f32 0.0, %v408
  %410 = vmatmul.f32.gmra.mxu0 %v133
  %v411 = vpop.f32.mrf.mxu0
  %v412 = vadd.f32 0.0, %v411
  %413 = vmatmul.f32.gmra.mxu0 %v134
  %v414 = vpop.f32.mrf.mxu0
  %v415 = vadd.f32 0.0, %v414
  %416 = vmatmul.f32.gmra.mxu0 %v135
  %v417 = vpop.f32.mrf.mxu0
  %v418 = vadd.f32 0.0, %v417
  %419 = vmatmul.f32.gmra.mxu0 %v136
  %v420 = vpop.f32.mrf.mxu0
  %v421 = vadd.f32 0.0, %v420
  %422 = vmatmul.f32.gmra.mxu0 %v137
  %v423 = vpop.f32.mrf.mxu0
  %v424 = vadd.f32 0.0, %v423
  %425 = vmatmul.f32.gmra.mxu0 %v138
  %v426 = vpop.f32.mrf.mxu0
  %v427 = vadd.f32 0.0, %v426
  %428 = vmatmul.f32.gmra.mxu0 %v139
  %v429 = vpop.f32.mrf.mxu0
  %v430 = vadd.f32 0.0, %v429
  %431 = vdwg.mxu0
  %432 = vmatpush.msra.mxu0 %v200
  %433 = vmatpush.msra.mxu0 %v196
  %434 = vmatpush.msra.mxu0 %v192
  %435 = vmatpush.msra.mxu0 %v188
  %436 = vmatpush.msra.mxu0 %v184
  %437 = vmatpush.msra.mxu0 %v180
  %438 = vmatpush.msra.mxu0 %v176
  %439 = vmatpush.msra.mxu0 %v172
  %440 = vmatpush.msra.mxu0 %v168
  %441 = vmatpush.msra.mxu0 %v164
  %442 = vmatpush.msra.mxu0 %v160
  %443 = vmatpush.msra.mxu0 %v156
  %444 = vmatpush.msra.mxu0 %v152
  %445 = vmatpush.msra.mxu0 %v148
  %446 = vmatpush.msra.mxu0 %v144
  %447 = vmatpush.msra.mxu0 %v140
  %448 = vmatmul.f32.gmra.mxu0 %v76
  %v449 = vpop.f32.mrf.mxu0
  %v450 = vadd.f32 %v286, %v449
  %451 = vmatmul.f32.gmra.mxu0 %v77
  %v452 = vpop.f32.mrf.mxu0
  %v453 = vadd.f32 %v289, %v452
  %454 = vmatmul.f32.gmra.mxu0 %v78
  %v455 = vpop.f32.mrf.mxu0
  %v456 = vadd.f32 %v292, %v455
  %457 = vmatmul.f32.gmra.mxu0 %v79
  %v458 = vpop.f32.mrf.mxu0
  %v459 = vadd.f32 %v295, %v458
  %460 = vmatmul.f32.gmra.mxu0 %v80
  %v461 = vpop.f32.mrf.mxu0
  %v462 = vadd.f32 %v298, %v461
  %463 = vmatmul.f32.gmra.mxu0 %v81
  %v464 = vpop.f32.mrf.mxu0
  %v465 = vadd.f32 %v301, %v464
  %466 = vmatmul.f32.gmra.mxu0 %v82
  %v467 = vpop.f32.mrf.mxu0
  %v468 = vadd.f32 %v304, %v467
  %469 = vmatmul.f32.gmra.mxu0 %v83
  %v470 = vpop.f32.mrf.mxu0
  %v471 = vadd.f32 %v307, %v470
  %472 = vdwg.mxu0
  %473 = vmatpush.msra.mxu0 %v201
  %474 = vmatpush.msra.mxu0 %v197
  %475 = vmatpush.msra.mxu0 %v193
  %476 = vmatpush.msra.mxu0 %v189
  %477 = vmatpush.msra.mxu0 %v185
  %478 = vmatpush.msra.mxu0 %v181
  %479 = vmatpush.msra.mxu0 %v177
  %480 = vmatpush.msra.mxu0 %v173
  %481 = vmatpush.msra.mxu0 %v169
  %482 = vmatpush.msra.mxu0 %v165
  %483 = vmatpush.msra.mxu0 %v161
  %484 = vmatpush.msra.mxu0 %v157
  %485 = vmatpush.msra.mxu0 %v153
  %486 = vmatpush.msra.mxu0 %v149
  %487 = vmatpush.msra.mxu0 %v145
  %488 = vmatpush.msra.mxu0 %v141
  %489 = vmatmul.f32.gmra.mxu0 %v76
  %v490 = vpop.f32.mrf.mxu0
  %v491 = vadd.f32 %v327, %v490
  %492 = vmatmul.f32.gmra.mxu0 %v77
  %v493 = vpop.f32.mrf.mxu0
  %v494 = vadd.f32 %v330, %v493
  %495 = vmatmul.f32.gmra.mxu0 %v78
  %v496 = vpop.f32.mrf.mxu0
  %v497 = vadd.f32 %v333, %v496
  %498 = vmatmul.f32.gmra.mxu0 %v79
  %v499 = vpop.f32.mrf.mxu0
  %v500 = vadd.f32 %v336, %v499
  %501 = vmatmul.f32.gmra.mxu0 %v80
  %v502 = vpop.f32.mrf.mxu0
  %v503 = vadd.f32 %v339, %v502
  %504 = vmatmul.f32.gmra.mxu0 %v81
  %v505 = vpop.f32.mrf.mxu0
  %v506 = vadd.f32 %v342, %v505
  %507 = vmatmul.f32.gmra.mxu0 %v82
  %v508 = vpop.f32.mrf.mxu0
  %v509 = vadd.f32 %v345, %v508
  %510 = vmatmul.f32.gmra.mxu0 %v83
  %v511 = vpop.f32.mrf.mxu0
  %v512 = vadd.f32 %v348, %v511
  %513 = vdwg.mxu0
  %514 = vmatpush.msra.mxu0 %v202
  %515 = vmatpush.msra.mxu0 %v198
  %516 = vmatpush.msra.mxu0 %v194
  %517 = vmatpush.msra.mxu0 %v190
  %518 = vmatpush.msra.mxu0 %v186
  %519 = vmatpush.msra.mxu0 %v182
  %520 = vmatpush.msra.mxu0 %v178
  %521 = vmatpush.msra.mxu0 %v174
  %522 = vmatpush.msra.mxu0 %v170
  %523 = vmatpush.msra.mxu0 %v166
  %524 = vmatpush.msra.mxu0 %v162
  %525 = vmatpush.msra.mxu0 %v158
  %526 = vmatpush.msra.mxu0 %v154
  %527 = vmatpush.msra.mxu0 %v150
  %528 = vmatpush.msra.mxu0 %v146
  %529 = vmatpush.msra.mxu0 %v142
  %530 = vmatmul.f32.gmra.mxu0 %v76
  %v531 = vpop.f32.mrf.mxu0
  %v532 = vadd.f32 %v368, %v531
  %533 = vmatmul.f32.gmra.mxu0 %v77
  %v534 = vpop.f32.mrf.mxu0
  %v535 = vadd.f32 %v371, %v534
  %536 = vmatmul.f32.gmra.mxu0 %v78
  %v537 = vpop.f32.mrf.mxu0
  %v538 = vadd.f32 %v374, %v537
  %539 = vmatmul.f32.gmra.mxu0 %v79
  %v540 = vpop.f32.mrf.mxu0
  %v541 = vadd.f32 %v377, %v540
  %542 = vmatmul.f32.gmra.mxu0 %v80
  %v543 = vpop.f32.mrf.mxu0
  %v544 = vadd.f32 %v380, %v543
  %545 = vmatmul.f32.gmra.mxu0 %v81
  %v546 = vpop.f32.mrf.mxu0
  %v547 = vadd.f32 %v383, %v546
  %548 = vmatmul.f32.gmra.mxu0 %v82
  %v549 = vpop.f32.mrf.mxu0
  %v550 = vadd.f32 %v386, %v549
  %551 = vmatmul.f32.gmra.mxu0 %v83
  %v552 = vpop.f32.mrf.mxu0
  %v553 = vadd.f32 %v389, %v552
  %554 = vdwg.mxu0
  %555 = vmatpush.msra.mxu0 %v203
  %556 = vmatpush.msra.mxu0 %v199
  %557 = vmatpush.msra.mxu0 %v195
  %558 = vmatpush.msra.mxu0 %v191
  %559 = vmatpush.msra.mxu0 %v187
  %560 = vmatpush.msra.mxu0 %v183
  %561 = vmatpush.msra.mxu0 %v179
  %562 = vmatpush.msra.mxu0 %v175
  %563 = vmatpush.msra.mxu0 %v171
  %564 = vmatpush.msra.mxu0 %v167
  %565 = vmatpush.msra.mxu0 %v163
  %566 = vmatpush.msra.mxu0 %v159
  %567 = vmatpush.msra.mxu0 %v155
  %568 = vmatpush.msra.mxu0 %v151
  %569 = vmatpush.msra.mxu0 %v147
  %570 = vmatpush.msra.mxu0 %v143
  %571 = vmatmul.f32.gmra.mxu0 %v76
  %v572 = vpop.f32.mrf.mxu0
  %v573 = vadd.f32 %v409, %v572
  %574 = vmatmul.f32.gmra.mxu0 %v77
  %v575 = vpop.f32.mrf.mxu0
  %v576 = vadd.f32 %v412, %v575
  %577 = vmatmul.f32.gmra.mxu0 %v78
  %v578 = vpop.f32.mrf.mxu0
  %v579 = vadd.f32 %v415, %v578
  %580 = vmatmul.f32.gmra.mxu0 %v79
  %v581 = vpop.f32.mrf.mxu0
  %v582 = vadd.f32 %v418, %v581
  %583 = vmatmul.f32.gmra.mxu0 %v80
  %v584 = vpop.f32.mrf.mxu0
  %v585 = vadd.f32 %v421, %v584
  %586 = vmatmul.f32.gmra.mxu0 %v81
  %v587 = vpop.f32.mrf.mxu0
  %v588 = vadd.f32 %v424, %v587
  %589 = vmatmul.f32.gmra.mxu0 %v82
  %v590 = vpop.f32.mrf.mxu0
  %v591 = vadd.f32 %v427, %v590
  %592 = vmatmul.f32.gmra.mxu0 %v83
  %v593 = vpop.f32.mrf.mxu0
  %v594 = vadd.f32 %v430, %v593
  %595 = vdwg.mxu0
  %v596 = vld [vmem:[%s5] sm:$0xf]
  %v598 = vperm.slane %v596, 0
  %v599 = vperm.slane %v596, 1
  %v600 = vperm.slane %v596, 2
  %v601 = vperm.slane %v596, 3
  %v606 = vadd.f32 %v450, %v598
  %v607 = vadd.f32 %v491, %v599
  %v608 = vadd.f32 %v532, %v600
  %v609 = vadd.f32 %v573, %v601
  %v610 = vadd.f32 %v453, %v598
  %v611 = vadd.f32 %v494, %v599
  %v612 = vadd.f32 %v535, %v600
  %v613 = vadd.f32 %v576, %v601
  %v614 = vadd.f32 %v456, %v598
  %v615 = vadd.f32 %v497, %v599
  %v616 = vadd.f32 %v538, %v600
  %v617 = vadd.f32 %v579, %v601
  %v618 = vadd.f32 %v459, %v598
  %v619 = vadd.f32 %v500, %v599
  %v620 = vadd.f32 %v541, %v600
  %v621 = vadd.f32 %v582, %v601
  %v622 = vadd.f32 %v462, %v598
  %v623 = vadd.f32 %v503, %v599
  %v624 = vadd.f32 %v544, %v600
  %v625 = vadd.f32 %v585, %v601
  %v626 = vadd.f32 %v465, %v598
  %v627 = vadd.f32 %v506, %v599
  %v628 = vadd.f32 %v547, %v600
  %v629 = vadd.f32 %v588, %v601
  %v630 = vadd.f32 %v468, %v598
  %v631 = vadd.f32 %v509, %v599
  %v632 = vadd.f32 %v550, %v600
  %v633 = vadd.f32 %v591, %v601
  %v634 = vadd.f32 %v471, %v598
  %v635 = vadd.f32 %v512, %v599
  %v636 = vadd.f32 %v553, %v600
  %v637 = vadd.f32 %v594, %v601
  %638 = vst [vmem:[#allocation2] sm:$0xff] %v606
  %639 = vst [vmem:[#allocation2 + $0x8] sm:$0xff] %v607
  %640 = vst [vmem:[#allocation2 + $0x10] sm:$0xff] %v608
  %641 = vst [vmem:[#allocation2 + $0x18] sm:$0xff] %v609
  %642 = vst [vmem:[#allocation2 + $0x20] sm:$0xff] %v610
  %643 = vst [vmem:[#allocation2 + $0x28] sm:$0xff] %v611
  %644 = vst [vmem:[#allocation2 + $0x30] sm:$0xff] %v612
  %645 = vst [vmem:[#allocation2 + $0x38] sm:$0xff] %v613
  %646 = vst [vmem:[#allocation2 + $0x40] sm:$0xff] %v614
  %647 = vst [vmem:[#allocation2 + $0x48] sm:$0xff] %v615
  %648 = vst [vmem:[#allocation2 + $0x50] sm:$0xff] %v616
  %649 = vst [vmem:[#allocation2 + $0x58] sm:$0xff] %v617
  %650 = vst [vmem:[#allocation2 + $0x60] sm:$0xff] %v618
  %651 = vst [vmem:[#allocation2 + $0x68] sm:$0xff] %v619
  %652 = vst [vmem:[#allocation2 + $0x70] sm:$0xff] %v620
  %653 = vst [vmem:[#allocation2 + $0x78] sm:$0xff] %v621
  %654 = vst [vmem:[#allocation2 + $0x80] sm:$0xff] %v622
  %655 = vst [vmem:[#allocation2 + $0x88] sm:$0xff] %v623
  %656 = vst [vmem:[#allocation2 + $0x90] sm:$0xff] %v624
  %657 = vst [vmem:[#allocation2 + $0x98] sm:$0xff] %v625
  %658 = vst [vmem:[#allocation2 + $0xa0] sm:$0xff] %v626
  %659 = vst [vmem:[#allocation2 + $0xa8] sm:$0xff] %v627
  %660 = vst [vmem:[#allocation2 + $0xb0] sm:$0xff] %v628
  %661 = vst [vmem:[#allocation2 + $0xb8] sm:$0xff] %v629
  %662 = vst [vmem:[#allocation2 + $0xc0] sm:$0xff] %v630
  %663 = vst [vmem:[#allocation2 + $0xc8] sm:$0xff] %v631
  %664 = vst [vmem:[#allocation2 + $0xd0] sm:$0xff] %v632
  %665 = vst [vmem:[#allocation2 + $0xd8] sm:$0xff] %v633
  %666 = vst [vmem:[#allocation2 + $0xe0] sm:$0xff] %v634
  %667 = vst [vmem:[#allocation2 + $0xe8] sm:$0xff] %v635
  %668 = vst [vmem:[#allocation2 + $0xf0] sm:$0xff] %v636
  %669 = vst [vmem:[#allocation2 + $0xf8] sm:$0xff] %v637
  %v670 = vld [vmem:[%s0] sm:$0xff]
  %v671 = vld [vmem:[%s6] sm:$0xff]
  %v672 = vld [vmem:[%s6 + $0x8] sm:$0xff]
  %v673 = vld [vmem:[%s6 + $0x10] sm:$0xff]
  %v674 = vld [vmem:[%s6 + $0x18] sm:$0xff]
  %v675 = vld [vmem:[%s6 + $0x20] sm:$0xff]
  %v676 = vld [vmem:[%s6 + $0x28] sm:$0xff]
  %v677 = vld [vmem:[%s6 + $0x30] sm:$0xff]
  %v678 = vld [vmem:[%s6 + $0x38] sm:$0xff]
  %v679 = vld [vmem:[%s6 + $0x40] sm:$0xff]
  %v680 = vld [vmem:[%s6 + $0x48] sm:$0xff]
  %v681 = vld [vmem:[%s6 + $0x50] sm:$0xff]
  %v682 = vld [vmem:[%s6 + $0x58] sm:$0xff]
  %v683 = vld [vmem:[%s6 + $0x60] sm:$0xff]
  %v684 = vld [vmem:[%s6 + $0x68] sm:$0xff]
  %v685 = vld [vmem:[%s6 + $0x70] sm:$0xff]
  %v686 = vld [vmem:[%s6 + $0x78] sm:$0xff]
  %v687 = vld [vmem:[%s6 + $0x80] sm:$0xff]
  %v688 = vld [vmem:[%s6 + $0x88] sm:$0xff]
  %v689 = vld [vmem:[%s6 + $0x90] sm:$0xff]
  %v690 = vld [vmem:[%s6 + $0x98] sm:$0xff]
  %v691 = vld [vmem:[%s6 + $0xa0] sm:$0xff]
  %v692 = vld [vmem:[%s6 + $0xa8] sm:$0xff]
  %v693 = vld [vmem:[%s6 + $0xb0] sm:$0xff]
  %v694 = vld [vmem:[%s6 + $0xb8] sm:$0xff]
  %v695 = vld [vmem:[%s6 + $0xc0] sm:$0xff]
  %v696 = vld [vmem:[%s6 + $0xc8] sm:$0xff]
  %v697 = vld [vmem:[%s6 + $0xd0] sm:$0xff]
  %v698 = vld [vmem:[%s6 + $0xd8] sm:$0xff]
  %v699 = vld [vmem:[%s6 + $0xe0] sm:$0xff]
  %v700 = vld [vmem:[%s6 + $0xe8] sm:$0xff]
  %v701 = vld [vmem:[%s6 + $0xf0] sm:$0xff]
  %v702 = vld [vmem:[%s6 + $0xf8] sm:$0xff]
  %v703 = vld [vmem:[%s6 + $0x100] sm:$0xff]
  %v704 = vld [vmem:[%s6 + $0x108] sm:$0xff]
  %v705 = vld [vmem:[%s6 + $0x110] sm:$0xff]
  %v706 = vld [vmem:[%s6 + $0x118] sm:$0xff]
  %v707 = vld [vmem:[%s6 + $0x120] sm:$0xff]
  %v708 = vld [vmem:[%s6 + $0x128] sm:$0xff]
  %v709 = vld [vmem:[%s6 + $0x130] sm:$0xff]
  %v710 = vld [vmem:[%s6 + $0x138] sm:$0xff]
  %v711 = vld [vmem:[%s6 + $0x140] sm:$0xff]
  %v712 = vld [vmem:[%s6 + $0x148] sm:$0xff]
  %v713 = vld [vmem:[%s6 + $0x150] sm:$0xff]
  %v714 = vld [vmem:[%s6 + $0x158] sm:$0xff]
  %v715 = vld [vmem:[%s6 + $0x160] sm:$0xff]
  %v716 = vld [vmem:[%s6 + $0x168] sm:$0xff]
  %v717 = vld [vmem:[%s6 + $0x170] sm:$0xff]
  %v718 = vld [vmem:[%s6 + $0x178] sm:$0xff]
  %v719 = vld [vmem:[%s6 + $0x180] sm:$0xff]
  %v720 = vld [vmem:[%s6 + $0x188] sm:$0xff]
  %v721 = vld [vmem:[%s6 + $0x190] sm:$0xff]
  %v722 = vld [vmem:[%s6 + $0x198] sm:$0xff]
  %v723 = vld [vmem:[%s6 + $0x1a0] sm:$0xff]
  %v724 = vld [vmem:[%s6 + $0x1a8] sm:$0xff]
  %v725 = vld [vmem:[%s6 + $0x1b0] sm:$0xff]
  %v726 = vld [vmem:[%s6 + $0x1b8] sm:$0xff]
  %v727 = vld [vmem:[%s6 + $0x1c0] sm:$0xff]
  %v728 = vld [vmem:[%s6 + $0x1c8] sm:$0xff]
  %v729 = vld [vmem:[%s6 + $0x1d0] sm:$0xff]
  %v730 = vld [vmem:[%s6 + $0x1d8] sm:$0xff]
  %v731 = vld [vmem:[%s6 + $0x1e0] sm:$0xff]
  %v732 = vld [vmem:[%s6 + $0x1e8] sm:$0xff]
  %v733 = vld [vmem:[%s6 + $0x1f0] sm:$0xff]
  %v734 = vld [vmem:[%s6 + $0x1f8] sm:$0xff]
  %s735 = smul.u32 0, 4
  %s736 = smul.addr %s735, 8
  %s737 = scalar_lea.vmem [#allocation2], %s736
  %v738 = vld [vmem:[%s737] sm:$0xff]
  %v739 = vld [vmem:[%s737 + $0x8] sm:$0xff]
  %v740 = vld [vmem:[%s737 + $0x10] sm:$0xff]
  %v741 = vld [vmem:[%s737 + $0x18] sm:$0xff]
  %742 = vmatpush.msra.mxu0 %v731
  %743 = vmatpush.msra.mxu0 %v727
  %744 = vmatpush.msra.mxu0 %v723
  %745 = vmatpush.msra.mxu0 %v719
  %746 = vmatpush.msra.mxu0 %v715
  %747 = vmatpush.msra.mxu0 %v711
  %748 = vmatpush.msra.mxu0 %v707
  %749 = vmatpush.msra.mxu0 %v703
  %750 = vmatpush.msra.mxu0 %v699
  %751 = vmatpush.msra.mxu0 %v695
  %752 = vmatpush.msra.mxu0 %v691
  %753 = vmatpush.msra.mxu0 %v687
  %754 = vmatpush.msra.mxu0 %v683
  %755 = vmatpush.msra.mxu0 %v679
  %756 = vmatpush.msra.mxu0 %v675
  %757 = vmatpush.msra.mxu0 %v671
  %758 = vmatmul.f32.gmra.mxu0 0.0
  %v759 = vpop.f32.mrf.mxu0
  %v760 = vadd.f32 0.0, %v759
  %761 = vdwg.mxu0
  %762 = vmatpush.msra.mxu0 %v732
  %763 = vmatpush.msra.mxu0 %v728
  %764 = vmatpush.msra.mxu0 %v724
  %765 = vmatpush.msra.mxu0 %v720
  %766 = vmatpush.msra.mxu0 %v716
  %767 = vmatpush.msra.mxu0 %v712
  %768 = vmatpush.msra.mxu0 %v708
  %769 = vmatpush.msra.mxu0 %v704
  %770 = vmatpush.msra.mxu0 %v700
  %771 = vmatpush.msra.mxu0 %v696
  %772 = vmatpush.msra.mxu0 %v692
  %773 = vmatpush.msra.mxu0 %v688
  %774 = vmatpush.msra.mxu0 %v684
  %775 = vmatpush.msra.mxu0 %v680
  %776 = vmatpush.msra.mxu0 %v676
  %777 = vmatpush.msra.mxu0 %v672
  %778 = vmatmul.f32.gmra.mxu0 0.0
  %v779 = vpop.f32.mrf.mxu0
  %v780 = vadd.f32 0.0, %v779
  %781 = vdwg.mxu0
  %782 = vmatpush.msra.mxu0 %v733
  %783 = vmatpush.msra.mxu0 %v729
  %784 = vmatpush.msra.mxu0 %v725
  %785 = vmatpush.msra.mxu0 %v721
  %786 = vmatpush.msra.mxu0 %v717
  %787 = vmatpush.msra.mxu0 %v713
  %788 = vmatpush.msra.mxu0 %v709
  %789 = vmatpush.msra.mxu0 %v705
  %790 = vmatpush.msra.mxu0 %v701
  %791 = vmatpush.msra.mxu0 %v697
  %792 = vmatpush.msra.mxu0 %v693
  %793 = vmatpush.msra.mxu0 %v689
  %794 = vmatpush.msra.mxu0 %v685
  %795 = vmatpush.msra.mxu0 %v681
  %796 = vmatpush.msra.mxu0 %v677
  %797 = vmatpush.msra.mxu0 %v673
  %798 = vmatmul.f32.gmra.mxu0 0.0
  %v799 = vpop.f32.mrf.mxu0
  %v800 = vadd.f32 0.0, %v799
  %801 = vdwg.mxu0
  %802 = vmatpush.msra.mxu0 %v734
  %803 = vmatpush.msra.mxu0 %v730
  %804 = vmatpush.msra.mxu0 %v726
  %805 = vmatpush.msra.mxu0 %v722
  %806 = vmatpush.msra.mxu0 %v718
  %807 = vmatpush.msra.mxu0 %v714
  %808 = vmatpush.msra.mxu0 %v710
  %809 = vmatpush.msra.mxu0 %v706
  %810 = vmatpush.msra.mxu0 %v702
  %811 = vmatpush.msra.mxu0 %v698
  %812 = vmatpush.msra.mxu0 %v694
  %813 = vmatpush.msra.mxu0 %v690
  %814 = vmatpush.msra.mxu0 %v686
  %815 = vmatpush.msra.mxu0 %v682
  %816 = vmatpush.msra.mxu0 %v678
  %817 = vmatpush.msra.mxu0 %v674
  %818 = vmatmul.f32.gmra.mxu0 0.0
  %v819 = vpop.f32.mrf.mxu0
  %v820 = vadd.f32 0.0, %v819
  %821 = vdwg.mxu0
  %v822 = vadd.f32 %v738, %v760
  %v823 = vadd.f32 %v739, %v780
  %v824 = vadd.f32 %v740, %v800
  %v825 = vadd.f32 %v741, %v820
  %v826 = vxor.u32 %v822, 2147483648
  %v827 = vxor.u32 %v823, 2147483648
  %v828 = vxor.u32 %v824, 2147483648
  %v829 = vmul.f32 %v826, 1.442695
  %v830 = vpow.pop %v829
  %v831 = vmul.f32 %v827, 1.442695
  %v832 = vpow.pop %v831
  %v833 = vmul.f32 %v828, 1.442695
  %v834 = vpow.pop %v833
  %v835 = vadd.f32 %v830, 1.0
  %v836 = vadd.f32 %v832, 1.0
  %v837 = vadd.f32 %v834, 1.0
  %v838 = vrcp.pop %v835
  %v839 = vmul.f32 %v835, %v838
  %v840 = vsub.f32 1.0, %v839
  %v841 = vmul.f32 %v838, %v840
  %v842 = vadd.f32 %v838, %v841
  %vm843 = vweird.f32 %v835
  %vm844 = vweird.f32 %v838
  %vm845 = vmor %vm843, %vm844
  %v846 = vsel %vm845, %v838, %v842
  %v847 = vand.u32 2147483647, %v835
  %vm848 = vcmp.eq.f32.partialorder %v847, 8.507059e+37
  %v849 = vand.u32 %v835, 2147483648
  %v850 = vor.u32 1.1754944e-38, %v849
  %v851 = vsel %vm848, %v850, %v846
  %v852 = vmul.f32 1.0, %v851
  %v853 = vrcp.pop %v836
  %v854 = vmul.f32 %v836, %v853
  %v855 = vsub.f32 1.0, %v854
  %v856 = vmul.f32 %v853, %v855
  %v857 = vadd.f32 %v853, %v856
  %vm858 = vweird.f32 %v836
  %vm859 = vweird.f32 %v853
  %vm860 = vmor %vm858, %vm859
  %v861 = vsel %vm860, %v853, %v857
  %v862 = vand.u32 2147483647, %v836
  %vm863 = vcmp.eq.f32.partialorder %v862, 8.507059e+37
  %v864 = vand.u32 %v836, 2147483648
  %v865 = vor.u32 1.1754944e-38, %v864
  %v866 = vsel %vm863, %v865, %v861
  %v867 = vmul.f32 1.0, %v866
  %v868 = vrcp.pop %v837
  %v869 = vmul.f32 %v837, %v868
  %v870 = vsub.f32 1.0, %v869
  %v871 = vmul.f32 %v868, %v870
  %v872 = vadd.f32 %v868, %v871
  %vm873 = vweird.f32 %v837
  %vm874 = vweird.f32 %v868
  %vm875 = vmor %vm873, %vm874
  %v876 = vsel %vm875, %v868, %v872
  %v877 = vand.u32 2147483647, %v837
  %vm878 = vcmp.eq.f32.partialorder %v877, 8.507059e+37
  %v879 = vand.u32 %v837, 2147483648
  %v880 = vor.u32 1.1754944e-38, %v879
  %v881 = vsel %vm878, %v880, %v876
  %v882 = vmul.f32 1.0, %v881
  %v883 = vtanh.pop %v825
  %v884 = vmul.f32 %v867, 0.0
  %v885 = vmul.f32 %v852, %v883
  %v886 = vadd.f32 %v884, %v885
  %v887 = vtanh.pop %v886
  %v888 = vmul.f32 %v882, %v887
  %vm889 = vcmp.gt.s32.totalorder %v670, 0
  %v890 = vsel %vm889, 1, 0
  %891 = vset.pattern.permute.xlu0 0
  %892 = vperm.xlu0 %891, %v890
  %v893 = vpop.permute.xlu0 %892
  %vm894 = vcmp.eq.s32.totalorder %v893, 1
  %v895 = vsel %vm894, %v888, 0.0
  %v896 = vsel %vm894, %v886, 0.0
  %s897 = smul.u32 1, 4
  %s898 = smul.addr %s897, 8
  %s899 = scalar_lea.vmem [#allocation2], %s898
  %v900 = vld [vmem:[%s899] sm:$0xff]
  %v901 = vld [vmem:[%s899 + $0x8] sm:$0xff]
  %v902 = vld [vmem:[%s899 + $0x10] sm:$0xff]
  %v903 = vld [vmem:[%s899 + $0x18] sm:$0xff]
  %904 = vmatpush.msra.mxu0 %v731
  %905 = vmatpush.msra.mxu0 %v727
  %906 = vmatpush.msra.mxu0 %v723
  %907 = vmatpush.msra.mxu0 %v719
  %908 = vmatpush.msra.mxu0 %v715
  %909 = vmatpush.msra.mxu0 %v711
  %910 = vmatpush.msra.mxu0 %v707
  %911 = vmatpush.msra.mxu0 %v703
  %912 = vmatpush.msra.mxu0 %v699
  %913 = vmatpush.msra.mxu0 %v695
  %914 = vmatpush.msra.mxu0 %v691
  %915 = vmatpush.msra.mxu0 %v687
  %916 = vmatpush.msra.mxu0 %v683
  %917 = vmatpush.msra.mxu0 %v679
  %918 = vmatpush.msra.mxu0 %v675
  %919 = vmatpush.msra.mxu0 %v671
  %920 = vmatmul.f32.gmra.mxu0 %v895
  %v921 = vpop.f32.mrf.mxu0
  %v922 = vadd.f32 0.0, %v921
  %923 = vdwg.mxu0
  %924 = vmatpush.msra.mxu0 %v732
  %925 = vmatpush.msra.mxu0 %v728
  %926 = vmatpush.msra.mxu0 %v724
  %927 = vmatpush.msra.mxu0 %v720
  %928 = vmatpush.msra.mxu0 %v716
  %929 = vmatpush.msra.mxu0 %v712
  %930 = vmatpush.msra.mxu0 %v708
  %931 = vmatpush.msra.mxu0 %v704
  %932 = vmatpush.msra.mxu0 %v700
  %933 = vmatpush.msra.mxu0 %v696
  %934 = vmatpush.msra.mxu0 %v692
  %935 = vmatpush.msra.mxu0 %v688
  %936 = vmatpush.msra.mxu0 %v684
  %937 = vmatpush.msra.mxu0 %v680
  %938 = vmatpush.msra.mxu0 %v676
  %939 = vmatpush.msra.mxu0 %v672
  %940 = vmatmul.f32.gmra.mxu0 %v895
  %v941 = vpop.f32.mrf.mxu0
  %v942 = vadd.f32 0.0, %v941
  %943 = vdwg.mxu0
  %944 = vmatpush.msra.mxu0 %v733
  %945 = vmatpush.msra.mxu0 %v729
  %946 = vmatpush.msra.mxu0 %v725
  %947 = vmatpush.msra.mxu0 %v721
  %948 = vmatpush.msra.mxu0 %v717
  %949 = vmatpush.msra.mxu0 %v713
  %950 = vmatpush.msra.mxu0 %v709
  %951 = vmatpush.msra.mxu0 %v705
  %952 = vmatpush.msra.mxu0 %v701
  %953 = vmatpush.msra.mxu0 %v697
  %954 = vmatpush.msra.mxu0 %v693
  %955 = vmatpush.msra.mxu0 %v689
  %956 = vmatpush.msra.mxu0 %v685
  %957 = vmatpush.msra.mxu0 %v681
  %958 = vmatpush.msra.mxu0 %v677
  %959 = vmatpush.msra.mxu0 %v673
  %960 = vmatmul.f32.gmra.mxu0 %v895
  %v961 = vpop.f32.mrf.mxu0
  %v962 = vadd.f32 0.0, %v961
  %963 = vdwg.mxu0
  %964 = vmatpush.msra.mxu0 %v734
  %965 = vmatpush.msra.mxu0 %v730
  %966 = vmatpush.msra.mxu0 %v726
  %967 = vmatpush.msra.mxu0 %v722
  %968 = vmatpush.msra.mxu0 %v718
  %969 = vmatpush.msra.mxu0 %v714
  %970 = vmatpush.msra.mxu0 %v710
  %971 = vmatpush.msra.mxu0 %v706
  %972 = vmatpush.msra.mxu0 %v702
  %973 = vmatpush.msra.mxu0 %v698
  %974 = vmatpush.msra.mxu0 %v694
  %975 = vmatpush.msra.mxu0 %v690
  %976 = vmatpush.msra.mxu0 %v686
  %977 = vmatpush.msra.mxu0 %v682
  %978 = vmatpush.msra.mxu0 %v678
  %979 = vmatpush.msra.mxu0 %v674
  %980 = vmatmul.f32.gmra.mxu0 %v895
  %v981 = vpop.f32.mrf.mxu0
  %v982 = vadd.f32 0.0, %v981
  %983 = vdwg.mxu0
  %v984 = vadd.f32 %v900, %v922
  %v985 = vadd.f32 %v901, %v942
  %v986 = vadd.f32 %v902, %v962
  %v987 = vadd.f32 %v903, %v982
  %v988 = vxor.u32 %v984, 2147483648
  %v989 = vxor.u32 %v985, 2147483648
  %v990 = vxor.u32 %v986, 2147483648
  %v991 = vmul.f32 %v988, 1.442695
  %v992 = vpow.pop %v991
  %v993 = vmul.f32 %v989, 1.442695
  %v994 = vpow.pop %v993
  %v995 = vmul.f32 %v990, 1.442695
  %v996 = vpow.pop %v995
  %v997 = vadd.f32 %v992, 1.0
  %v998 = vadd.f32 %v994, 1.0
  %v999 = vadd.f32 %v996, 1.0
  %v1000 = vrcp.pop %v997
  %v1001 = vmul.f32 %v997, %v1000
  %v1002 = vsub.f32 1.0, %v1001
  %v1003 = vmul.f32 %v1000, %v1002
  %v1004 = vadd.f32 %v1000, %v1003
  %vm1005 = vweird.f32 %v997
  %vm1006 = vweird.f32 %v1000
  %vm1007 = vmor %vm1005, %vm1006
  %v1008 = vsel %vm1007, %v1000, %v1004
  %v1009 = vand.u32 2147483647, %v997
  %vm1010 = vcmp.eq.f32.partialorder %v1009, 8.507059e+37
  %v1011 = vand.u32 %v997, 2147483648
  %v1012 = vor.u32 1.1754944e-38, %v1011
  %v1013 = vsel %vm1010, %v1012, %v1008
  %v1014 = vmul.f32 1.0, %v1013
  %v1015 = vrcp.pop %v998
  %v1016 = vmul.f32 %v998, %v1015
  %v1017 = vsub.f32 1.0, %v1016
  %v1018 = vmul.f32 %v1015, %v1017
  %v1019 = vadd.f32 %v1015, %v1018
  %vm1020 = vweird.f32 %v998
  %vm1021 = vweird.f32 %v1015
  %vm1022 = vmor %vm1020, %vm1021
  %v1023 = vsel %vm1022, %v1015, %v1019
  %v1024 = vand.u32 2147483647, %v998
  %vm1025 = vcmp.eq.f32.partialorder %v1024, 8.507059e+37
  %v1026 = vand.u32 %v998, 2147483648
  %v1027 = vor.u32 1.1754944e-38, %v1026
  %v1028 = vsel %vm1025, %v1027, %v1023
  %v1029 = vmul.f32 1.0, %v1028
  %v1030 = vrcp.pop %v999
  %v1031 = vmul.f32 %v999, %v1030
  %v1032 = vsub.f32 1.0, %v1031
  %v1033 = vmul.f32 %v1030, %v1032
  %v1034 = vadd.f32 %v1030, %v1033
  %vm1035 = vweird.f32 %v999
  %vm1036 = vweird.f32 %v1030
  %vm1037 = vmor %vm1035, %vm1036
  %v1038 = vsel %vm1037, %v1030, %v1034
  %v1039 = vand.u32 2147483647, %v999
  %vm1040 = vcmp.eq.f32.partialorder %v1039, 8.507059e+37
  %v1041 = vand.u32 %v999, 2147483648
  %v1042 = vor.u32 1.1754944e-38, %v1041
  %v1043 = vsel %vm1040, %v1042, %v1038
  %v1044 = vmul.f32 1.0, %v1043
  %v1045 = vtanh.pop %v987
  %v1046 = vmul.f32 %v1029, %v896
  %v1047 = vmul.f32 %v1014, %v1045
  %v1048 = vadd.f32 %v1046, %v1047
  %v1049 = vtanh.pop %v1048
  %v1050 = vmul.f32 %v1044, %v1049
  %vm1051 = vcmp.gt.s32.totalorder %v670, 1
  %v1052 = vsel %vm1051, 1, 0
  %1053 = vset.pattern.permute.xlu0 0
  %1054 = vperm.xlu0 %1053, %v1052
  %v1055 = vpop.permute.xlu0 %1054
  %vm1056 = vcmp.eq.s32.totalorder %v1055, 1
  %v1057 = vsel %vm1056, %v1050, %v895
  %v1058 = vsel %vm1056, %v1048, %v896
  %s1059 = smul.u32 2, 4
  %s1060 = smul.addr %s1059, 8
  %s1061 = scalar_lea.vmem [#allocation2], %s1060
  %v1062 = vld [vmem:[%s1061] sm:$0xff]
  %v1063 = vld [vmem:[%s1061 + $0x8] sm:$0xff]
  %v1064 = vld [vmem:[%s1061 + $0x10] sm:$0xff]
  %v1065 = vld [vmem:[%s1061 + $0x18] sm:$0xff]
  %1066 = vmatpush.msra.mxu0 %v731
  %1067 = vmatpush.msra.mxu0 %v727
  %1068 = vmatpush.msra.mxu0 %v723
  %1069 = vmatpush.msra.mxu0 %v719
  %1070 = vmatpush.msra.mxu0 %v715
  %1071 = vmatpush.msra.mxu0 %v711
  %1072 = vmatpush.msra.mxu0 %v707
  %1073 = vmatpush.msra.mxu0 %v703
  %1074 = vmatpush.msra.mxu0 %v699
  %1075 = vmatpush.msra.mxu0 %v695
  %1076 = vmatpush.msra.mxu0 %v691
  %1077 = vmatpush.msra.mxu0 %v687
  %1078 = vmatpush.msra.mxu0 %v683
  %1079 = vmatpush.msra.mxu0 %v679
  %1080 = vmatpush.msra.mxu0 %v675
  %1081 = vmatpush.msra.mxu0 %v671
  %1082 = vmatmul.f32.gmra.mxu0 %v1057
  %v1083 = vpop.f32.mrf.mxu0
  %v1084 = vadd.f32 0.0, %v1083
  %1085 = vdwg.mxu0
  %1086 = vmatpush.msra.mxu0 %v732
  %1087 = vmatpush.msra.mxu0 %v728
  %1088 = vmatpush.msra.mxu0 %v724
  %1089 = vmatpush.msra.mxu0 %v720
  %1090 = vmatpush.msra.mxu0 %v716
  %1091 = vmatpush.msra.mxu0 %v712
  %1092 = vmatpush.msra.mxu0 %v708
  %1093 = vmatpush.msra.mxu0 %v704
  %1094 = vmatpush.msra.mxu0 %v700
  %1095 = vmatpush.msra.mxu0 %v696
  %1096 = vmatpush.msra.mxu0 %v692
  %1097 = vmatpush.msra.mxu0 %v688
  %1098 = vmatpush.msra.mxu0 %v684
  %1099 = vmatpush.msra.mxu0 %v680
  %1100 = vmatpush.msra.mxu0 %v676
  %1101 = vmatpush.msra.mxu0 %v672
  %1102 = vmatmul.f32.gmra.mxu0 %v1057
  %v1103 = vpop.f32.mrf.mxu0
  %v1104 = vadd.f32 0.0, %v1103
  %1105 = vdwg.mxu0
  %1106 = vmatpush.msra.mxu0 %v733
  %1107 = vmatpush.msra.mxu0 %v729
  %1108 = vmatpush.msra.mxu0 %v725
  %1109 = vmatpush.msra.mxu0 %v721
  %1110 = vmatpush.msra.mxu0 %v717
  %1111 = vmatpush.msra.mxu0 %v713
  %1112 = vmatpush.msra.mxu0 %v709
  %1113 = vmatpush.msra.mxu0 %v705
  %1114 = vmatpush.msra.mxu0 %v701
  %1115 = vmatpush.msra.mxu0 %v697
  %1116 = vmatpush.msra.mxu0 %v693
  %1117 = vmatpush.msra.mxu0 %v689
  %1118 = vmatpush.msra.mxu0 %v685
  %1119 = vmatpush.msra.mxu0 %v681
  %1120 = vmatpush.msra.mxu0 %v677
  %1121 = vmatpush.msra.mxu0 %v673
  %1122 = vmatmul.f32.gmra.mxu0 %v1057
  %v1123 = vpop.f32.mrf.mxu0
  %v1124 = vadd.f32 0.0, %v1123
  %1125 = vdwg.mxu0
  %1126 = vmatpush.msra.mxu0 %v734
  %1127 = vmatpush.msra.mxu0 %v730
  %1128 = vmatpush.msra.mxu0 %v726
  %1129 = vmatpush.msra.mxu0 %v722
  %1130 = vmatpush.msra.mxu0 %v718
  %1131 = vmatpush.msra.mxu0 %v714
  %1132 = vmatpush.msra.mxu0 %v710
  %1133 = vmatpush.msra.mxu0 %v706
  %1134 = vmatpush.msra.mxu0 %v702
  %1135 = vmatpush.msra.mxu0 %v698
  %1136 = vmatpush.msra.mxu0 %v694
  %1137 = vmatpush.msra.mxu0 %v690
  %1138 = vmatpush.msra.mxu0 %v686
  %1139 = vmatpush.msra.mxu0 %v682
  %1140 = vmatpush.msra.mxu0 %v678
  %1141 = vmatpush.msra.mxu0 %v674
  %1142 = vmatmul.f32.gmra.mxu0 %v1057
  %v1143 = vpop.f32.mrf.mxu0
  %v1144 = vadd.f32 0.0, %v1143
  %1145 = vdwg.mxu0
  %v1146 = vadd.f32 %v1062, %v1084
  %v1147 = vadd.f32 %v1063, %v1104
  %v1148 = vadd.f32 %v1064, %v1124
  %v1149 = vadd.f32 %v1065, %v1144
  %v1150 = vxor.u32 %v1146, 2147483648
  %v1151 = vxor.u32 %v1147, 2147483648
  %v1152 = vxor.u32 %v1148, 2147483648
  %v1153 = vmul.f32 %v1150, 1.442695
  %v1154 = vpow.pop %v1153
  %v1155 = vmul.f32 %v1151, 1.442695
  %v1156 = vpow.pop %v1155
  %v1157 = vmul.f32 %v1152, 1.442695
  %v1158 = vpow.pop %v1157
  %v1159 = vadd.f32 %v1154, 1.0
  %v1160 = vadd.f32 %v1156, 1.0
  %v1161 = vadd.f32 %v1158, 1.0
  %v1162 = vrcp.pop %v1159
  %v1163 = vmul.f32 %v1159, %v1162
  %v1164 = vsub.f32 1.0, %v1163
  %v1165 = vmul.f32 %v1162, %v1164
  %v1166 = vadd.f32 %v1162, %v1165
  %vm1167 = vweird.f32 %v1159
  %vm1168 = vweird.f32 %v1162
  %vm1169 = vmor %vm1167, %vm1168
  %v1170 = vsel %vm1169, %v1162, %v1166
  %v1171 = vand.u32 2147483647, %v1159
  %vm1172 = vcmp.eq.f32.partialorder %v1171, 8.507059e+37
  %v1173 = vand.u32 %v1159, 2147483648
  %v1174 = vor.u32 1.1754944e-38, %v1173
  %v1175 = vsel %vm1172, %v1174, %v1170
  %v1176 = vmul.f32 1.0, %v1175
  %v1177 = vrcp.pop %v1160
  %v1178 = vmul.f32 %v1160, %v1177
  %v1179 = vsub.f32 1.0, %v1178
  %v1180 = vmul.f32 %v1177, %v1179
  %v1181 = vadd.f32 %v1177, %v1180
  %vm1182 = vweird.f32 %v1160
  %vm1183 = vweird.f32 %v1177
  %vm1184 = vmor %vm1182, %vm1183
  %v1185 = vsel %vm1184, %v1177, %v1181
  %v1186 = vand.u32 2147483647, %v1160
  %vm1187 = vcmp.eq.f32.partialorder %v1186, 8.507059e+37
  %v1188 = vand.u32 %v1160, 2147483648
  %v1189 = vor.u32 1.1754944e-38, %v1188
  %v1190 = vsel %vm1187, %v1189, %v1185
  %v1191 = vmul.f32 1.0, %v1190
  %v1192 = vrcp.pop %v1161
  %v1193 = vmul.f32 %v1161, %v1192
  %v1194 = vsub.f32 1.0, %v1193
  %v1195 = vmul.f32 %v1192, %v1194
  %v1196 = vadd.f32 %v1192, %v1195
  %vm1197 = vweird.f32 %v1161
  %vm1198 = vweird.f32 %v1192
  %vm1199 = vmor %vm1197, %vm1198
  %v1200 = vsel %vm1199, %v1192, %v1196
  %v1201 = vand.u32 2147483647, %v1161
  %vm1202 = vcmp.eq.f32.partialorder %v1201, 8.507059e+37
  %v1203 = vand.u32 %v1161, 2147483648
  %v1204 = vor.u32 1.1754944e-38, %v1203
  %v1205 = vsel %vm1202, %v1204, %v1200
  %v1206 = vmul.f32 1.0, %v1205
  %v1207 = vtanh.pop %v1149
  %v1208 = vmul.f32 %v1191, %v1058
  %v1209 = vmul.f32 %v1176, %v1207
  %v1210 = vadd.f32 %v1208, %v1209
  %v1211 = vtanh.pop %v1210
  %v1212 = vmul.f32 %v1206, %v1211
  %vm1213 = vcmp.gt.s32.totalorder %v670, 2
  %v1214 = vsel %vm1213, 1, 0
  %1215 = vset.pattern.permute.xlu0 0
  %1216 = vperm.xlu0 %1215, %v1214
  %v1217 = vpop.permute.xlu0 %1216
  %vm1218 = vcmp.eq.s32.totalorder %v1217, 1
  %v1219 = vsel %vm1218, %v1212, %v1057
  %v1220 = vsel %vm1218, %v1210, %v1058
  %s1221 = smul.u32 3, 4
  %s1222 = smul.addr %s1221, 8
  %s1223 = scalar_lea.vmem [#allocation2], %s1222
  %v1224 = vld [vmem:[%s1223] sm:$0xff]
  %v1225 = vld [vmem:[%s1223 + $0x8] sm:$0xff]
  %v1226 = vld [vmem:[%s1223 + $0x10] sm:$0xff]
  %v1227 = vld [vmem:[%s1223 + $0x18] sm:$0xff]
  %1228 = vmatpush.msra.mxu0 %v731
  %1229 = vmatpush.msra.mxu0 %v727
  %1230 = vmatpush.msra.mxu0 %v723
  %1231 = vmatpush.msra.mxu0 %v719
  %1232 = vmatpush.msra.mxu0 %v715
  %1233 = vmatpush.msra.mxu0 %v711
  %1234 = vmatpush.msra.mxu0 %v707
  %1235 = vmatpush.msra.mxu0 %v703
  %1236 = vmatpush.msra.mxu0 %v699
  %1237 = vmatpush.msra.mxu0 %v695
  %1238 = vmatpush.msra.mxu0 %v691
  %1239 = vmatpush.msra.mxu0 %v687
  %1240 = vmatpush.msra.mxu0 %v683
  %1241 = vmatpush.msra.mxu0 %v679
  %1242 = vmatpush.msra.mxu0 %v675
  %1243 = vmatpush.msra.mxu0 %v671
  %1244 = vmatmul.f32.gmra.mxu0 %v1219
  %v1245 = vpop.f32.mrf.mxu0
  %v1246 = vadd.f32 0.0, %v1245
  %1247 = vdwg.mxu0
  %1248 = vmatpush.msra.mxu0 %v732
  %1249 = vmatpush.msra.mxu0 %v728
  %1250 = vmatpush.msra.mxu0 %v724
  %1251 = vmatpush.msra.mxu0 %v720
  %1252 = vmatpush.msra.mxu0 %v716
  %1253 = vmatpush.msra.mxu0 %v712
  %1254 = vmatpush.msra.mxu0 %v708
  %1255 = vmatpush.msra.mxu0 %v704
  %1256 = vmatpush.msra.mxu0 %v700
  %1257 = vmatpush.msra.mxu0 %v696
  %1258 = vmatpush.msra.mxu0 %v692
  %1259 = vmatpush.msra.mxu0 %v688
  %1260 = vmatpush.msra.mxu0 %v684
  %1261 = vmatpush.msra.mxu0 %v680
  %1262 = vmatpush.msra.mxu0 %v676
  %1263 = vmatpush.msra.mxu0 %v672
  %1264 = vmatmul.f32.gmra.mxu0 %v1219
  %v1265 = vpop.f32.mrf.mxu0
  %v1266 = vadd.f32 0.0, %v1265
  %1267 = vdwg.mxu0
  %1268 = vmatpush.msra.mxu0 %v733
  %1269 = vmatpush.msra.mxu0 %v729
  %1270 = vmatpush.msra.mxu0 %v725
  %1271 = vmatpush.msra.mxu0 %v721
  %1272 = vmatpush.msra.mxu0 %v717
  %1273 = vmatpush.msra.mxu0 %v713
  %1274 = vmatpush.msra.mxu0 %v709
  %1275 = vmatpush.msra.mxu0 %v705
  %1276 = vmatpush.msra.mxu0 %v701
  %1277 = vmatpush.msra.mxu0 %v697
  %1278 = vmatpush.msra.mxu0 %v693
  %1279 = vmatpush.msra.mxu0 %v689
  %1280 = vmatpush.msra.mxu0 %v685
  %1281 = vmatpush.msra.mxu0 %v681
  %1282 = vmatpush.msra.mxu0 %v677
  %1283 = vmatpush.msra.mxu0 %v673
  %1284 = vmatmul.f32.gmra.mxu0 %v1219
  %v1285 = vpop.f32.mrf.mxu0
  %v1286 = vadd.f32 0.0, %v1285
  %1287 = vdwg.mxu0
  %1288 = vmatpush.msra.mxu0 %v734
  %1289 = vmatpush.msra.mxu0 %v730
  %1290 = vmatpush.msra.mxu0 %v726
  %1291 = vmatpush.msra.mxu0 %v722
  %1292 = vmatpush.msra.mxu0 %v718
  %1293 = vmatpush.msra.mxu0 %v714
  %1294 = vmatpush.msra.mxu0 %v710
  %1295 = vmatpush.msra.mxu0 %v706
  %1296 = vmatpush.msra.mxu0 %v702
  %1297 = vmatpush.msra.mxu0 %v698
  %1298 = vmatpush.msra.mxu0 %v694
  %1299 = vmatpush.msra.mxu0 %v690
  %1300 = vmatpush.msra.mxu0 %v686
  %1301 = vmatpush.msra.mxu0 %v682
  %1302 = vmatpush.msra.mxu0 %v678
  %1303 = vmatpush.msra.mxu0 %v674
  %1304 = vmatmul.f32.gmra.mxu0 %v1219
  %v1305 = vpop.f32.mrf.mxu0
  %v1306 = vadd.f32 0.0, %v1305
  %1307 = vdwg.mxu0
  %v1308 = vadd.f32 %v1224, %v1246
  %v1309 = vadd.f32 %v1225, %v1266
  %v1310 = vadd.f32 %v1226, %v1286
  %v1311 = vadd.f32 %v1227, %v1306
  %v1312 = vxor.u32 %v1308, 2147483648
  %v1313 = vxor.u32 %v1309, 2147483648
  %v1314 = vxor.u32 %v1310, 2147483648
  %v1315 = vmul.f32 %v1312, 1.442695
  %v1316 = vpow.pop %v1315
  %v1317 = vmul.f32 %v1313, 1.442695
  %v1318 = vpow.pop %v1317
  %v1319 = vmul.f32 %v1314, 1.442695
  %v1320 = vpow.pop %v1319
  %v1321 = vadd.f32 %v1316, 1.0
  %v1322 = vadd.f32 %v1318, 1.0
  %v1323 = vadd.f32 %v1320, 1.0
  %v1324 = vrcp.pop %v1321
  %v1325 = vmul.f32 %v1321, %v1324
  %v1326 = vsub.f32 1.0, %v1325
  %v1327 = vmul.f32 %v1324, %v1326
  %v1328 = vadd.f32 %v1324, %v1327
  %vm1329 = vweird.f32 %v1321
  %vm1330 = vweird.f32 %v1324
  %vm1331 = vmor %vm1329, %vm1330
  %v1332 = vsel %vm1331, %v1324, %v1328
  %v1333 = vand.u32 2147483647, %v1321
  %vm1334 = vcmp.eq.f32.partialorder %v1333, 8.507059e+37
  %v1335 = vand.u32 %v1321, 2147483648
  %v1336 = vor.u32 1.1754944e-38, %v1335
  %v1337 = vsel %vm1334, %v1336, %v1332
  %v1338 = vmul.f32 1.0, %v1337
  %v1339 = vrcp.pop %v1322
  %v1340 = vmul.f32 %v1322, %v1339
  %v1341 = vsub.f32 1.0, %v1340
  %v1342 = vmul.f32 %v1339, %v1341
  %v1343 = vadd.f32 %v1339, %v1342
  %vm1344 = vweird.f32 %v1322
  %vm1345 = vweird.f32 %v1339
  %vm1346 = vmor %vm1344, %vm1345
  %v1347 = vsel %vm1346, %v1339, %v1343
  %v1348 = vand.u32 2147483647, %v1322
  %vm1349 = vcmp.eq.f32.partialorder %v1348, 8.507059e+37
  %v1350 = vand.u32 %v1322, 2147483648
  %v1351 = vor.u32 1.1754944e-38, %v1350
  %v1352 = vsel %vm1349, %v1351, %v1347
  %v1353 = vmul.f32 1.0, %v1352
  %v1354 = vrcp.pop %v1323
  %v1355 = vmul.f32 %v1323, %v1354
  %v1356 = vsub.f32 1.0, %v1355
  %v1357 = vmul.f32 %v1354, %v1356
  %v1358 = vadd.f32 %v1354, %v1357
  %vm1359 = vweird.f32 %v1323
  %vm1360 = vweird.f32 %v1354
  %vm1361 = vmor %vm1359, %vm1360
  %v1362 = vsel %vm1361, %v1354, %v1358
  %v1363 = vand.u32 2147483647, %v1323
  %vm1364 = vcmp.eq.f32.partialorder %v1363, 8.507059e+37
  %v1365 = vand.u32 %v1323, 2147483648
  %v1366 = vor.u32 1.1754944e-38, %v1365
  %v1367 = vsel %vm1364, %v1366, %v1362
  %v1368 = vmul.f32 1.0, %v1367
  %v1369 = vtanh.pop %v1311
  %v1370 = vmul.f32 %v1353, %v1220
  %v1371 = vmul.f32 %v1338, %v1369
  %v1372 = vadd.f32 %v1370, %v1371
  %v1373 = vtanh.pop %v1372
  %v1374 = vmul.f32 %v1368, %v1373
  %vm1375 = vcmp.gt.s32.totalorder %v670, 3
  %v1376 = vsel %vm1375, 1, 0
  %1377 = vset.pattern.permute.xlu0 0
  %1378 = vperm.xlu0 %1377, %v1376
  %v1379 = vpop.permute.xlu0 %1378
  %vm1380 = vcmp.eq.s32.totalorder %v1379, 1
  %v1381 = vsel %vm1380, %v1374, %v1219
  %v1382 = vsel %vm1380, %v1372, %v1220
  %s1383 = smul.u32 4, 4
  %s1384 = smul.addr %s1383, 8
  %s1385 = scalar_lea.vmem [#allocation2], %s1384
  %v1386 = vld [vmem:[%s1385] sm:$0xff]
  %v1387 = vld [vmem:[%s1385 + $0x8] sm:$0xff]
  %v1388 = vld [vmem:[%s1385 + $0x10] sm:$0xff]
  %v1389 = vld [vmem:[%s1385 + $0x18] sm:$0xff]
  %1390 = vmatpush.msra.mxu0 %v731
  %1391 = vmatpush.msra.mxu0 %v727
  %1392 = vmatpush.msra.mxu0 %v723
  %1393 = vmatpush.msra.mxu0 %v719
  %1394 = vmatpush.msra.mxu0 %v715
  %1395 = vmatpush.msra.mxu0 %v711
  %1396 = vmatpush.msra.mxu0 %v707
  %1397 = vmatpush.msra.mxu0 %v703
  %1398 = vmatpush.msra.mxu0 %v699
  %1399 = vmatpush.msra.mxu0 %v695
  %1400 = vmatpush.msra.mxu0 %v691
  %1401 = vmatpush.msra.mxu0 %v687
  %1402 = vmatpush.msra.mxu0 %v683
  %1403 = vmatpush.msra.mxu0 %v679
  %1404 = vmatpush.msra.mxu0 %v675
  %1405 = vmatpush.msra.mxu0 %v671
  %1406 = vmatmul.f32.gmra.mxu0 %v1381
  %v1407 = vpop.f32.mrf.mxu0
  %v1408 = vadd.f32 0.0, %v1407
  %1409 = vdwg.mxu0
  %1410 = vmatpush.msra.mxu0 %v732
  %1411 = vmatpush.msra.mxu0 %v728
  %1412 = vmatpush.msra.mxu0 %v724
  %1413 = vmatpush.msra.mxu0 %v720
  %1414 = vmatpush.msra.mxu0 %v716
  %1415 = vmatpush.msra.mxu0 %v712
  %1416 = vmatpush.msra.mxu0 %v708
  %1417 = vmatpush.msra.mxu0 %v704
  %1418 = vmatpush.msra.mxu0 %v700
  %1419 = vmatpush.msra.mxu0 %v696
  %1420 = vmatpush.msra.mxu0 %v692
  %1421 = vmatpush.msra.mxu0 %v688
  %1422 = vmatpush.msra.mxu0 %v684
  %1423 = vmatpush.msra.mxu0 %v680
  %1424 = vmatpush.msra.mxu0 %v676
  %1425 = vmatpush.msra.mxu0 %v672
  %1426 = vmatmul.f32.gmra.mxu0 %v1381
  %v1427 = vpop.f32.mrf.mxu0
  %v1428 = vadd.f32 0.0, %v1427
  %1429 = vdwg.mxu0
  %1430 = vmatpush.msra.mxu0 %v733
  %1431 = vmatpush.msra.mxu0 %v729
  %1432 = vmatpush.msra.mxu0 %v725
  %1433 = vmatpush.msra.mxu0 %v721
  %1434 = vmatpush.msra.mxu0 %v717
  %1435 = vmatpush.msra.mxu0 %v713
  %1436 = vmatpush.msra.mxu0 %v709
  %1437 = vmatpush.msra.mxu0 %v705
  %1438 = vmatpush.msra.mxu0 %v701
  %1439 = vmatpush.msra.mxu0 %v697
  %1440 = vmatpush.msra.mxu0 %v693
  %1441 = vmatpush.msra.mxu0 %v689
  %1442 = vmatpush.msra.mxu0 %v685
  %1443 = vmatpush.msra.mxu0 %v681
  %1444 = vmatpush.msra.mxu0 %v677
  %1445 = vmatpush.msra.mxu0 %v673
  %1446 = vmatmul.f32.gmra.mxu0 %v1381
  %v1447 = vpop.f32.mrf.mxu0
  %v1448 = vadd.f32 0.0, %v1447
  %1449 = vdwg.mxu0
  %1450 = vmatpush.msra.mxu0 %v734
  %1451 = vmatpush.msra.mxu0 %v730
  %1452 = vmatpush.msra.mxu0 %v726
  %1453 = vmatpush.msra.mxu0 %v722
  %1454 = vmatpush.msra.mxu0 %v718
  %1455 = vmatpush.msra.mxu0 %v714
  %1456 = vmatpush.msra.mxu0 %v710
  %1457 = vmatpush.msra.mxu0 %v706
  %1458 = vmatpush.msra.mxu0 %v702
  %1459 = vmatpush.msra.mxu0 %v698
  %1460 = vmatpush.msra.mxu0 %v694
  %1461 = vmatpush.msra.mxu0 %v690
  %1462 = vmatpush.msra.mxu0 %v686
  %1463 = vmatpush.msra.mxu0 %v682
  %1464 = vmatpush.msra.mxu0 %v678
  %1465 = vmatpush.msra.mxu0 %v674
  %1466 = vmatmul.f32.gmra.mxu0 %v1381
  %v1467 = vpop.f32.mrf.mxu0
  %v1468 = vadd.f32 0.0, %v1467
  %1469 = vdwg.mxu0
  %v1470 = vadd.f32 %v1386, %v1408
  %v1471 = vadd.f32 %v1387, %v1428
  %v1472 = vadd.f32 %v1388, %v1448
  %v1473 = vadd.f32 %v1389, %v1468
  %v1474 = vxor.u32 %v1470, 2147483648
  %v1475 = vxor.u32 %v1471, 2147483648
  %v1476 = vxor.u32 %v1472, 2147483648
  %v1477 = vmul.f32 %v1474, 1.442695
  %v1478 = vpow.pop %v1477
  %v1479 = vmul.f32 %v1475, 1.442695
  %v1480 = vpow.pop %v1479
  %v1481 = vmul.f32 %v1476, 1.442695
  %v1482 = vpow.pop %v1481
  %v1483 = vadd.f32 %v1478, 1.0
  %v1484 = vadd.f32 %v1480, 1.0
  %v1485 = vadd.f32 %v1482, 1.0
  %v1486 = vrcp.pop %v1483
  %v1487 = vmul.f32 %v1483, %v1486
  %v1488 = vsub.f32 1.0, %v1487
  %v1489 = vmul.f32 %v1486, %v1488
  %v1490 = vadd.f32 %v1486, %v1489
  %vm1491 = vweird.f32 %v1483
  %vm1492 = vweird.f32 %v1486
  %vm1493 = vmor %vm1491, %vm1492
  %v1494 = vsel %vm1493, %v1486, %v1490
  %v1495 = vand.u32 2147483647, %v1483
  %vm1496 = vcmp.eq.f32.partialorder %v1495, 8.507059e+37
  %v1497 = vand.u32 %v1483, 2147483648
  %v1498 = vor.u32 1.1754944e-38, %v1497
  %v1499 = vsel %vm1496, %v1498, %v1494
  %v1500 = vmul.f32 1.0, %v1499
  %v1501 = vrcp.pop %v1484
  %v1502 = vmul.f32 %v1484, %v1501
  %v1503 = vsub.f32 1.0, %v1502
  %v1504 = vmul.f32 %v1501, %v1503
  %v1505 = vadd.f32 %v1501, %v1504
  %vm1506 = vweird.f32 %v1484
  %vm1507 = vweird.f32 %v1501
  %vm1508 = vmor %vm1506, %vm1507
  %v1509 = vsel %vm1508, %v1501, %v1505
  %v1510 = vand.u32 2147483647, %v1484
  %vm1511 = vcmp.eq.f32.partialorder %v1510, 8.507059e+37
  %v1512 = vand.u32 %v1484, 2147483648
  %v1513 = vor.u32 1.1754944e-38, %v1512
  %v1514 = vsel %vm1511, %v1513, %v1509
  %v1515 = vmul.f32 1.0, %v1514
  %v1516 = vrcp.pop %v1485
  %v1517 = vmul.f32 %v1485, %v1516
  %v1518 = vsub.f32 1.0, %v1517
  %v1519 = vmul.f32 %v1516, %v1518
  %v1520 = vadd.f32 %v1516, %v1519
  %vm1521 = vweird.f32 %v1485
  %vm1522 = vweird.f32 %v1516
  %vm1523 = vmor %vm1521, %vm1522
  %v1524 = vsel %vm1523, %v1516, %v1520
  %v1525 = vand.u32 2147483647, %v1485
  %vm1526 = vcmp.eq.f32.partialorder %v1525, 8.507059e+37
  %v1527 = vand.u32 %v1485, 2147483648
  %v1528 = vor.u32 1.1754944e-38, %v1527
  %v1529 = vsel %vm1526, %v1528, %v1524
  %v1530 = vmul.f32 1.0, %v1529
  %v1531 = vtanh.pop %v1473
  %v1532 = vmul.f32 %v1515, %v1382
  %v1533 = vmul.f32 %v1500, %v1531
  %v1534 = vadd.f32 %v1532, %v1533
  %v1535 = vtanh.pop %v1534
  %v1536 = vmul.f32 %v1530, %v1535
  %vm1537 = vcmp.gt.s32.totalorder %v670, 4
  %v1538 = vsel %vm1537, 1, 0
  %1539 = vset.pattern.permute.xlu0 0
  %1540 = vperm.xlu0 %1539, %v1538
  %v1541 = vpop.permute.xlu0 %1540
  %vm1542 = vcmp.eq.s32.totalorder %v1541, 1
  %v1543 = vsel %vm1542, %v1536, %v1381
  %v1544 = vsel %vm1542, %v1534, %v1382
  %s1545 = smul.u32 5, 4
  %s1546 = smul.addr %s1545, 8
  %s1547 = scalar_lea.vmem [#allocation2], %s1546
  %v1548 = vld [vmem:[%s1547] sm:$0xff]
  %v1549 = vld [vmem:[%s1547 + $0x8] sm:$0xff]
  %v1550 = vld [vmem:[%s1547 + $0x10] sm:$0xff]
  %v1551 = vld [vmem:[%s1547 + $0x18] sm:$0xff]
  %1552 = vmatpush.msra.mxu0 %v731
  %1553 = vmatpush.msra.mxu0 %v727
  %1554 = vmatpush.msra.mxu0 %v723
  %1555 = vmatpush.msra.mxu0 %v719
  %1556 = vmatpush.msra.mxu0 %v715
  %1557 = vmatpush.msra.mxu0 %v711
  %1558 = vmatpush.msra.mxu0 %v707
  %1559 = vmatpush.msra.mxu0 %v703
  %1560 = vmatpush.msra.mxu0 %v699
  %1561 = vmatpush.msra.mxu0 %v695
  %1562 = vmatpush.msra.mxu0 %v691
  %1563 = vmatpush.msra.mxu0 %v687
  %1564 = vmatpush.msra.mxu0 %v683
  %1565 = vmatpush.msra.mxu0 %v679
  %1566 = vmatpush.msra.mxu0 %v675
  %1567 = vmatpush.msra.mxu0 %v671
  %1568 = vmatmul.f32.gmra.mxu0 %v1543
  %v1569 = vpop.f32.mrf.mxu0
  %v1570 = vadd.f32 0.0, %v1569
  %1571 = vdwg.mxu0
  %1572 = vmatpush.msra.mxu0 %v732
  %1573 = vmatpush.msra.mxu0 %v728
  %1574 = vmatpush.msra.mxu0 %v724
  %1575 = vmatpush.msra.mxu0 %v720
  %1576 = vmatpush.msra.mxu0 %v716
  %1577 = vmatpush.msra.mxu0 %v712
  %1578 = vmatpush.msra.mxu0 %v708
  %1579 = vmatpush.msra.mxu0 %v704
  %1580 = vmatpush.msra.mxu0 %v700
  %1581 = vmatpush.msra.mxu0 %v696
  %1582 = vmatpush.msra.mxu0 %v692
  %1583 = vmatpush.msra.mxu0 %v688
  %1584 = vmatpush.msra.mxu0 %v684
  %1585 = vmatpush.msra.mxu0 %v680
  %1586 = vmatpush.msra.mxu0 %v676
  %1587 = vmatpush.msra.mxu0 %v672
  %1588 = vmatmul.f32.gmra.mxu0 %v1543
  %v1589 = vpop.f32.mrf.mxu0
  %v1590 = vadd.f32 0.0, %v1589
  %1591 = vdwg.mxu0
  %1592 = vmatpush.msra.mxu0 %v733
  %1593 = vmatpush.msra.mxu0 %v729
  %1594 = vmatpush.msra.mxu0 %v725
  %1595 = vmatpush.msra.mxu0 %v721
  %1596 = vmatpush.msra.mxu0 %v717
  %1597 = vmatpush.msra.mxu0 %v713
  %1598 = vmatpush.msra.mxu0 %v709
  %1599 = vmatpush.msra.mxu0 %v705
  %1600 = vmatpush.msra.mxu0 %v701
  %1601 = vmatpush.msra.mxu0 %v697
  %1602 = vmatpush.msra.mxu0 %v693
  %1603 = vmatpush.msra.mxu0 %v689
  %1604 = vmatpush.msra.mxu0 %v685
  %1605 = vmatpush.msra.mxu0 %v681
  %1606 = vmatpush.msra.mxu0 %v677
  %1607 = vmatpush.msra.mxu0 %v673
  %1608 = vmatmul.f32.gmra.mxu0 %v1543
  %v1609 = vpop.f32.mrf.mxu0
  %v1610 = vadd.f32 0.0, %v1609
  %1611 = vdwg.mxu0
  %1612 = vmatpush.msra.mxu0 %v734
  %1613 = vmatpush.msra.mxu0 %v730
  %1614 = vmatpush.msra.mxu0 %v726
  %1615 = vmatpush.msra.mxu0 %v722
  %1616 = vmatpush.msra.mxu0 %v718
  %1617 = vmatpush.msra.mxu0 %v714
  %1618 = vmatpush.msra.mxu0 %v710
  %1619 = vmatpush.msra.mxu0 %v706
  %1620 = vmatpush.msra.mxu0 %v702
  %1621 = vmatpush.msra.mxu0 %v698
  %1622 = vmatpush.msra.mxu0 %v694
  %1623 = vmatpush.msra.mxu0 %v690
  %1624 = vmatpush.msra.mxu0 %v686
  %1625 = vmatpush.msra.mxu0 %v682
  %1626 = vmatpush.msra.mxu0 %v678
  %1627 = vmatpush.msra.mxu0 %v674
  %1628 = vmatmul.f32.gmra.mxu0 %v1543
  %v1629 = vpop.f32.mrf.mxu0
  %v1630 = vadd.f32 0.0, %v1629
  %1631 = vdwg.mxu0
  %v1632 = vadd.f32 %v1548, %v1570
  %v1633 = vadd.f32 %v1549, %v1590
  %v1634 = vadd.f32 %v1550, %v1610
  %v1635 = vadd.f32 %v1551, %v1630
  %v1636 = vxor.u32 %v1632, 2147483648
  %v1637 = vxor.u32 %v1633, 2147483648
  %v1638 = vxor.u32 %v1634, 2147483648
  %v1639 = vmul.f32 %v1636, 1.442695
  %v1640 = vpow.pop %v1639
  %v1641 = vmul.f32 %v1637, 1.442695
  %v1642 = vpow.pop %v1641
  %v1643 = vmul.f32 %v1638, 1.442695
  %v1644 = vpow.pop %v1643
  %v1645 = vadd.f32 %v1640, 1.0
  %v1646 = vadd.f32 %v1642, 1.0
  %v1647 = vadd.f32 %v1644, 1.0
  %v1648 = vrcp.pop %v1645
  %v1649 = vmul.f32 %v1645, %v1648
  %v1650 = vsub.f32 1.0, %v1649
  %v1651 = vmul.f32 %v1648, %v1650
  %v1652 = vadd.f32 %v1648, %v1651
  %vm1653 = vweird.f32 %v1645
  %vm1654 = vweird.f32 %v1648
  %vm1655 = vmor %vm1653, %vm1654
  %v1656 = vsel %vm1655, %v1648, %v1652
  %v1657 = vand.u32 2147483647, %v1645
  %vm1658 = vcmp.eq.f32.partialorder %v1657, 8.507059e+37
  %v1659 = vand.u32 %v1645, 2147483648
  %v1660 = vor.u32 1.1754944e-38, %v1659
  %v1661 = vsel %vm1658, %v1660, %v1656
  %v1662 = vmul.f32 1.0, %v1661
  %v1663 = vrcp.pop %v1646
  %v1664 = vmul.f32 %v1646, %v1663
  %v1665 = vsub.f32 1.0, %v1664
  %v1666 = vmul.f32 %v1663, %v1665
  %v1667 = vadd.f32 %v1663, %v1666
  %vm1668 = vweird.f32 %v1646
  %vm1669 = vweird.f32 %v1663
  %vm1670 = vmor %vm1668, %vm1669
  %v1671 = vsel %vm1670, %v1663, %v1667
  %v1672 = vand.u32 2147483647, %v1646
  %vm1673 = vcmp.eq.f32.partialorder %v1672, 8.507059e+37
  %v1674 = vand.u32 %v1646, 2147483648
  %v1675 = vor.u32 1.1754944e-38, %v1674
  %v1676 = vsel %vm1673, %v1675, %v1671
  %v1677 = vmul.f32 1.0, %v1676
  %v1678 = vrcp.pop %v1647
  %v1679 = vmul.f32 %v1647, %v1678
  %v1680 = vsub.f32 1.0, %v1679
  %v1681 = vmul.f32 %v1678, %v1680
  %v1682 = vadd.f32 %v1678, %v1681
  %vm1683 = vweird.f32 %v1647
  %vm1684 = vweird.f32 %v1678
  %vm1685 = vmor %vm1683, %vm1684
  %v1686 = vsel %vm1685, %v1678, %v1682
  %v1687 = vand.u32 2147483647, %v1647
  %vm1688 = vcmp.eq.f32.partialorder %v1687, 8.507059e+37
  %v1689 = vand.u32 %v1647, 2147483648
  %v1690 = vor.u32 1.1754944e-38, %v1689
  %v1691 = vsel %vm1688, %v1690, %v1686
  %v1692 = vmul.f32 1.0, %v1691
  %v1693 = vtanh.pop %v1635
  %v1694 = vmul.f32 %v1677, %v1544
  %v1695 = vmul.f32 %v1662, %v1693
  %v1696 = vadd.f32 %v1694, %v1695
  %v1697 = vtanh.pop %v1696
  %v1698 = vmul.f32 %v1692, %v1697
  %vm1699 = vcmp.gt.s32.totalorder %v670, 5
  %v1700 = vsel %vm1699, 1, 0
  %1701 = vset.pattern.permute.xlu0 0
  %1702 = vperm.xlu0 %1701, %v1700
  %v1703 = vpop.permute.xlu0 %1702
  %vm1704 = vcmp.eq.s32.totalorder %v1703, 1
  %v1705 = vsel %vm1704, %v1698, %v1543
  %v1706 = vsel %vm1704, %v1696, %v1544
  %s1707 = smul.u32 6, 4
  %s1708 = smul.addr %s1707, 8
  %s1709 = scalar_lea.vmem [#allocation2], %s1708
  %v1710 = vld [vmem:[%s1709] sm:$0xff]
  %v1711 = vld [vmem:[%s1709 + $0x8] sm:$0xff]
  %v1712 = vld [vmem:[%s1709 + $0x10] sm:$0xff]
  %v1713 = vld [vmem:[%s1709 + $0x18] sm:$0xff]
  %1714 = vmatpush.msra.mxu0 %v731
  %1715 = vmatpush.msra.mxu0 %v727
  %1716 = vmatpush.msra.mxu0 %v723
  %1717 = vmatpush.msra.mxu0 %v719
  %1718 = vmatpush.msra.mxu0 %v715
  %1719 = vmatpush.msra.mxu0 %v711
  %1720 = vmatpush.msra.mxu0 %v707
  %1721 = vmatpush.msra.mxu0 %v703
  %1722 = vmatpush.msra.mxu0 %v699
  %1723 = vmatpush.msra.mxu0 %v695
  %1724 = vmatpush.msra.mxu0 %v691
  %1725 = vmatpush.msra.mxu0 %v687
  %1726 = vmatpush.msra.mxu0 %v683
  %1727 = vmatpush.msra.mxu0 %v679
  %1728 = vmatpush.msra.mxu0 %v675
  %1729 = vmatpush.msra.mxu0 %v671
  %1730 = vmatmul.f32.gmra.mxu0 %v1705
  %v1731 = vpop.f32.mrf.mxu0
  %v1732 = vadd.f32 0.0, %v1731
  %1733 = vdwg.mxu0
  %1734 = vmatpush.msra.mxu0 %v732
  %1735 = vmatpush.msra.mxu0 %v728
  %1736 = vmatpush.msra.mxu0 %v724
  %1737 = vmatpush.msra.mxu0 %v720
  %1738 = vmatpush.msra.mxu0 %v716
  %1739 = vmatpush.msra.mxu0 %v712
  %1740 = vmatpush.msra.mxu0 %v708
  %1741 = vmatpush.msra.mxu0 %v704
  %1742 = vmatpush.msra.mxu0 %v700
  %1743 = vmatpush.msra.mxu0 %v696
  %1744 = vmatpush.msra.mxu0 %v692
  %1745 = vmatpush.msra.mxu0 %v688
  %1746 = vmatpush.msra.mxu0 %v684
  %1747 = vmatpush.msra.mxu0 %v680
  %1748 = vmatpush.msra.mxu0 %v676
  %1749 = vmatpush.msra.mxu0 %v672
  %1750 = vmatmul.f32.gmra.mxu0 %v1705
  %v1751 = vpop.f32.mrf.mxu0
  %v1752 = vadd.f32 0.0, %v1751
  %1753 = vdwg.mxu0
  %1754 = vmatpush.msra.mxu0 %v733
  %1755 = vmatpush.msra.mxu0 %v729
  %1756 = vmatpush.msra.mxu0 %v725
  %1757 = vmatpush.msra.mxu0 %v721
  %1758 = vmatpush.msra.mxu0 %v717
  %1759 = vmatpush.msra.mxu0 %v713
  %1760 = vmatpush.msra.mxu0 %v709
  %1761 = vmatpush.msra.mxu0 %v705
  %1762 = vmatpush.msra.mxu0 %v701
  %1763 = vmatpush.msra.mxu0 %v697
  %1764 = vmatpush.msra.mxu0 %v693
  %1765 = vmatpush.msra.mxu0 %v689
  %1766 = vmatpush.msra.mxu0 %v685
  %1767 = vmatpush.msra.mxu0 %v681
  %1768 = vmatpush.msra.mxu0 %v677
  %1769 = vmatpush.msra.mxu0 %v673
  %1770 = vmatmul.f32.gmra.mxu0 %v1705
  %v1771 = vpop.f32.mrf.mxu0
  %v1772 = vadd.f32 0.0, %v1771
  %1773 = vdwg.mxu0
  %1774 = vmatpush.msra.mxu0 %v734
  %1775 = vmatpush.msra.mxu0 %v730
  %1776 = vmatpush.msra.mxu0 %v726
  %1777 = vmatpush.msra.mxu0 %v722
  %1778 = vmatpush.msra.mxu0 %v718
  %1779 = vmatpush.msra.mxu0 %v714
  %1780 = vmatpush.msra.mxu0 %v710
  %1781 = vmatpush.msra.mxu0 %v706
  %1782 = vmatpush.msra.mxu0 %v702
  %1783 = vmatpush.msra.mxu0 %v698
  %1784 = vmatpush.msra.mxu0 %v694
  %1785 = vmatpush.msra.mxu0 %v690
  %1786 = vmatpush.msra.mxu0 %v686
  %1787 = vmatpush.msra.mxu0 %v682
  %1788 = vmatpush.msra.mxu0 %v678
  %1789 = vmatpush.msra.mxu0 %v674
  %1790 = vmatmul.f32.gmra.mxu0 %v1705
  %v1791 = vpop.f32.mrf.mxu0
  %v1792 = vadd.f32 0.0, %v1791
  %1793 = vdwg.mxu0
  %v1794 = vadd.f32 %v1710, %v1732
  %v1795 = vadd.f32 %v1711, %v1752
  %v1796 = vadd.f32 %v1712, %v1772
  %v1797 = vadd.f32 %v1713, %v1792
  %v1798 = vxor.u32 %v1794, 2147483648
  %v1799 = vxor.u32 %v1795, 2147483648
  %v1800 = vxor.u32 %v1796, 2147483648
  %v1801 = vmul.f32 %v1798, 1.442695
  %v1802 = vpow.pop %v1801
  %v1803 = vmul.f32 %v1799, 1.442695
  %v1804 = vpow.pop %v1803
  %v1805 = vmul.f32 %v1800, 1.442695
  %v1806 = vpow.pop %v1805
  %v1807 = vadd.f32 %v1802, 1.0
  %v1808 = vadd.f32 %v1804, 1.0
  %v1809 = vadd.f32 %v1806, 1.0
  %v1810 = vrcp.pop %v1807
  %v1811 = vmul.f32 %v1807, %v1810
  %v1812 = vsub.f32 1.0, %v1811
  %v1813 = vmul.f32 %v1810, %v1812
  %v1814 = vadd.f32 %v1810, %v1813
  %vm1815 = vweird.f32 %v1807
  %vm1816 = vweird.f32 %v1810
  %vm1817 = vmor %vm1815, %vm1816
  %v1818 = vsel %vm1817, %v1810, %v1814
  %v1819 = vand.u32 2147483647, %v1807
  %vm1820 = vcmp.eq.f32.partialorder %v1819, 8.507059e+37
  %v1821 = vand.u32 %v1807, 2147483648
  %v1822 = vor.u32 1.1754944e-38, %v1821
  %v1823 = vsel %vm1820, %v1822, %v1818
  %v1824 = vmul.f32 1.0, %v1823
  %v1825 = vrcp.pop %v1808
  %v1826 = vmul.f32 %v1808, %v1825
  %v1827 = vsub.f32 1.0, %v1826
  %v1828 = vmul.f32 %v1825, %v1827
  %v1829 = vadd.f32 %v1825, %v1828
  %vm1830 = vweird.f32 %v1808
  %vm1831 = vweird.f32 %v1825
  %vm1832 = vmor %vm1830, %vm1831
  %v1833 = vsel %vm1832, %v1825, %v1829
  %v1834 = vand.u32 2147483647, %v1808
  %vm1835 = vcmp.eq.f32.partialorder %v1834, 8.507059e+37
  %v1836 = vand.u32 %v1808, 2147483648
  %v1837 = vor.u32 1.1754944e-38, %v1836
  %v1838 = vsel %vm1835, %v1837, %v1833
  %v1839 = vmul.f32 1.0, %v1838
  %v1840 = vrcp.pop %v1809
  %v1841 = vmul.f32 %v1809, %v1840
  %v1842 = vsub.f32 1.0, %v1841
  %v1843 = vmul.f32 %v1840, %v1842
  %v1844 = vadd.f32 %v1840, %v1843
  %vm1845 = vweird.f32 %v1809
  %vm1846 = vweird.f32 %v1840
  %vm1847 = vmor %vm1845, %vm1846
  %v1848 = vsel %vm1847, %v1840, %v1844
  %v1849 = vand.u32 2147483647, %v1809
  %vm1850 = vcmp.eq.f32.partialorder %v1849, 8.507059e+37
  %v1851 = vand.u32 %v1809, 2147483648
  %v1852 = vor.u32 1.1754944e-38, %v1851
  %v1853 = vsel %vm1850, %v1852, %v1848
  %v1854 = vmul.f32 1.0, %v1853
  %v1855 = vtanh.pop %v1797
  %v1856 = vmul.f32 %v1839, %v1706
  %v1857 = vmul.f32 %v1824, %v1855
  %v1858 = vadd.f32 %v1856, %v1857
  %v1859 = vtanh.pop %v1858
  %v1860 = vmul.f32 %v1854, %v1859
  %vm1861 = vcmp.gt.s32.totalorder %v670, 6
  %v1862 = vsel %vm1861, 1, 0
  %1863 = vset.pattern.permute.xlu0 0
  %1864 = vperm.xlu0 %1863, %v1862
  %v1865 = vpop.permute.xlu0 %1864
  %vm1866 = vcmp.eq.s32.totalorder %v1865, 1
  %v1867 = vsel %vm1866, %v1860, %v1705
  %v1868 = vsel %vm1866, %v1858, %v1706
  %s1869 = smul.u32 7, 4
  %s1870 = smul.addr %s1869, 8
  %s1871 = scalar_lea.vmem [#allocation2], %s1870
  %v1872 = vld [vmem:[%s1871] sm:$0xff]
  %v1873 = vld [vmem:[%s1871 + $0x8] sm:$0xff]
  %v1874 = vld [vmem:[%s1871 + $0x10] sm:$0xff]
  %v1875 = vld [vmem:[%s1871 + $0x18] sm:$0xff]
  %1876 = vmatpush.msra.mxu0 %v731
  %1877 = vmatpush.msra.mxu0 %v727
  %1878 = vmatpush.msra.mxu0 %v723
  %1879 = vmatpush.msra.mxu0 %v719
  %1880 = vmatpush.msra.mxu0 %v715
  %1881 = vmatpush.msra.mxu0 %v711
  %1882 = vmatpush.msra.mxu0 %v707
  %1883 = vmatpush.msra.mxu0 %v703
  %1884 = vmatpush.msra.mxu0 %v699
  %1885 = vmatpush.msra.mxu0 %v695
  %1886 = vmatpush.msra.mxu0 %v691
  %1887 = vmatpush.msra.mxu0 %v687
  %1888 = vmatpush.msra.mxu0 %v683
  %1889 = vmatpush.msra.mxu0 %v679
  %1890 = vmatpush.msra.mxu0 %v675
  %1891 = vmatpush.msra.mxu0 %v671
  %1892 = vmatmul.f32.gmra.mxu0 %v1867
  %v1893 = vpop.f32.mrf.mxu0
  %v1894 = vadd.f32 0.0, %v1893
  %1895 = vdwg.mxu0
  %1896 = vmatpush.msra.mxu0 %v732
  %1897 = vmatpush.msra.mxu0 %v728
  %1898 = vmatpush.msra.mxu0 %v724
  %1899 = vmatpush.msra.mxu0 %v720
  %1900 = vmatpush.msra.mxu0 %v716
  %1901 = vmatpush.msra.mxu0 %v712
  %1902 = vmatpush.msra.mxu0 %v708
  %1903 = vmatpush.msra.mxu0 %v704
  %1904 = vmatpush.msra.mxu0 %v700
  %1905 = vmatpush.msra.mxu0 %v696
  %1906 = vmatpush.msra.mxu0 %v692
  %1907 = vmatpush.msra.mxu0 %v688
  %1908 = vmatpush.msra.mxu0 %v684
  %1909 = vmatpush.msra.mxu0 %v680
  %1910 = vmatpush.msra.mxu0 %v676
  %1911 = vmatpush.msra.mxu0 %v672
  %1912 = vmatmul.f32.gmra.mxu0 %v1867
  %v1913 = vpop.f32.mrf.mxu0
  %v1914 = vadd.f32 0.0, %v1913
  %1915 = vdwg.mxu0
  %1916 = vmatpush.msra.mxu0 %v733
  %1917 = vmatpush.msra.mxu0 %v729
  %1918 = vmatpush.msra.mxu0 %v725
  %1919 = vmatpush.msra.mxu0 %v721
  %1920 = vmatpush.msra.mxu0 %v717
  %1921 = vmatpush.msra.mxu0 %v713
  %1922 = vmatpush.msra.mxu0 %v709
  %1923 = vmatpush.msra.mxu0 %v705
  %1924 = vmatpush.msra.mxu0 %v701
  %1925 = vmatpush.msra.mxu0 %v697
  %1926 = vmatpush.msra.mxu0 %v693
  %1927 = vmatpush.msra.mxu0 %v689
  %1928 = vmatpush.msra.mxu0 %v685
  %1929 = vmatpush.msra.mxu0 %v681
  %1930 = vmatpush.msra.mxu0 %v677
  %1931 = vmatpush.msra.mxu0 %v673
  %1932 = vmatmul.f32.gmra.mxu0 %v1867
  %v1933 = vpop.f32.mrf.mxu0
  %v1934 = vadd.f32 0.0, %v1933
  %1935 = vdwg.mxu0
  %1936 = vmatpush.msra.mxu0 %v734
  %1937 = vmatpush.msra.mxu0 %v730
  %1938 = vmatpush.msra.mxu0 %v726
  %1939 = vmatpush.msra.mxu0 %v722
  %1940 = vmatpush.msra.mxu0 %v718
  %1941 = vmatpush.msra.mxu0 %v714
  %1942 = vmatpush.msra.mxu0 %v710
  %1943 = vmatpush.msra.mxu0 %v706
  %1944 = vmatpush.msra.mxu0 %v702
  %1945 = vmatpush.msra.mxu0 %v698
  %1946 = vmatpush.msra.mxu0 %v694
  %1947 = vmatpush.msra.mxu0 %v690
  %1948 = vmatpush.msra.mxu0 %v686
  %1949 = vmatpush.msra.mxu0 %v682
  %1950 = vmatpush.msra.mxu0 %v678
  %1951 = vmatpush.msra.mxu0 %v674
  %1952 = vmatmul.f32.gmra.mxu0 %v1867
  %v1953 = vpop.f32.mrf.mxu0
  %v1954 = vadd.f32 0.0, %v1953
  %1955 = vdwg.mxu0
  %v1956 = vadd.f32 %v1872, %v1894
  %v1957 = vadd.f32 %v1873, %v1914
  %v1958 = vadd.f32 %v1874, %v1934
  %v1959 = vadd.f32 %v1875, %v1954
  %v1960 = vxor.u32 %v1956, 2147483648
  %v1961 = vxor.u32 %v1957, 2147483648
  %v1962 = vxor.u32 %v1958, 2147483648
  %v1963 = vmul.f32 %v1960, 1.442695
  %v1964 = vpow.pop %v1963
  %v1965 = vmul.f32 %v1961, 1.442695
  %v1966 = vpow.pop %v1965
  %v1967 = vmul.f32 %v1962, 1.442695
  %v1968 = vpow.pop %v1967
  %v1969 = vadd.f32 %v1964, 1.0
  %v1970 = vadd.f32 %v1966, 1.0
  %v1971 = vadd.f32 %v1968, 1.0
  %v1972 = vrcp.pop %v1969
  %v1973 = vmul.f32 %v1969, %v1972
  %v1974 = vsub.f32 1.0, %v1973
  %v1975 = vmul.f32 %v1972, %v1974
  %v1976 = vadd.f32 %v1972, %v1975
  %vm1977 = vweird.f32 %v1969
  %vm1978 = vweird.f32 %v1972
  %vm1979 = vmor %vm1977, %vm1978
  %v1980 = vsel %vm1979, %v1972, %v1976
  %v1981 = vand.u32 2147483647, %v1969
  %vm1982 = vcmp.eq.f32.partialorder %v1981, 8.507059e+37
  %v1983 = vand.u32 %v1969, 2147483648
  %v1984 = vor.u32 1.1754944e-38, %v1983
  %v1985 = vsel %vm1982, %v1984, %v1980
  %v1986 = vmul.f32 1.0, %v1985
  %v1987 = vrcp.pop %v1970
  %v1988 = vmul.f32 %v1970, %v1987
  %v1989 = vsub.f32 1.0, %v1988
  %v1990 = vmul.f32 %v1987, %v1989
  %v1991 = vadd.f32 %v1987, %v1990
  %vm1992 = vweird.f32 %v1970
  %vm1993 = vweird.f32 %v1987
  %vm1994 = vmor %vm1992, %vm1993
  %v1995 = vsel %vm1994, %v1987, %v1991
  %v1996 = vand.u32 2147483647, %v1970
  %vm1997 = vcmp.eq.f32.partialorder %v1996, 8.507059e+37
  %v1998 = vand.u32 %v1970, 2147483648
  %v1999 = vor.u32 1.1754944e-38, %v1998
  %v2000 = vsel %vm1997, %v1999, %v1995
  %v2001 = vmul.f32 1.0, %v2000
  %v2002 = vrcp.pop %v1971
  %v2003 = vmul.f32 %v1971, %v2002
  %v2004 = vsub.f32 1.0, %v2003
  %v2005 = vmul.f32 %v2002, %v2004
  %v2006 = vadd.f32 %v2002, %v2005
  %vm2007 = vweird.f32 %v1971
  %vm2008 = vweird.f32 %v2002
  %vm2009 = vmor %vm2007, %vm2008
  %v2010 = vsel %vm2009, %v2002, %v2006
  %v2011 = vand.u32 2147483647, %v1971
  %vm2012 = vcmp.eq.f32.partialorder %v2011, 8.507059e+37
  %v2013 = vand.u32 %v1971, 2147483648
  %v2014 = vor.u32 1.1754944e-38, %v2013
  %v2015 = vsel %vm2012, %v2014, %v2010
  %v2016 = vmul.f32 1.0, %v2015
  %v2017 = vtanh.pop %v1959
  %v2018 = vmul.f32 %v2001, %v1868
  %v2019 = vmul.f32 %v1986, %v2017
  %v2020 = vadd.f32 %v2018, %v2019
  %v2021 = vtanh.pop %v2020
  %v2022 = vmul.f32 %v2016, %v2021
  %vm2023 = vcmp.gt.s32.totalorder %v670, 7
  %v2024 = vsel %vm2023, 1, 0
  %2025 = vset.pattern.permute.xlu0 0
  %2026 = vperm.xlu0 %2025, %v2024
  %v2027 = vpop.permute.xlu0 %2026
  %vm2028 = vcmp.eq.s32.totalorder %v2027, 1
  %v2029 = vsel %vm2028, %v2022, %v1867
  %2030 = vst [vmem:[%s7] sm:$0xff] %v2029
  // Predicated region
  $region30: #{char_lstm_embedding.1} parent=0 // pred_check
    _
  $region31: #{char_lstm_embedding.1} parent=0 // pred_check_branch
    %2032 = sbr.rel (0) target = $region33
  $region32: #{char_lstm_embedding.1} parent=0 // pred_region
    _
  $region33: #{char_lstm_embedding.1} parent=0 // pred_fallthru
    _
  // Predicated region
  $region34: #{char_lstm_embedding.1} parent=0 // pred_check
    _
  $region35: #{char_lstm_embedding.1} parent=0 // pred_check_branch
    %2034 = sbr.rel (0) target = $region37
  $region36: #{char_lstm_embedding.1} parent=0 // pred_region
    _
  $region37: #{char_lstm_embedding.1} parent=0 // pred_fallthru
    _

</llo_original>
